<compile_context>
chip_gen: v5e
topology: v5e:2x2
jax: 0.10.0
libtpu: 0.0.40
codegen_flags: <defaults>
</compile_context>

<pallas_src>
import jax
import jax.numpy as jnp
from jax.experimental import pallas as pl
from jax.experimental.pallas import tpu as pltpu

C_IN, C_OUT, K = 3, 5, 3


def conv_add_kernel(w_ref, b_ref, x_ref, add_ref, out_ref):
    # w_ref   : SMEM flat [C_OUT*C_IN*K*K] conv weights (scalar reads)
    # b_ref   : SMEM [C_OUT] bias
    # x_ref   : VMEM [C_IN, H, W]      (one batch element, unpadded)
    # add_ref : VMEM [C_OUT, HO, WO]   residual input
    # out_ref : VMEM [C_OUT, HO, WO]
    HO = out_ref.shape[-2]
    WO = out_ref.shape[-1]

    # Accumulators initialized with bias (hoisted out of the spatial loops).
    accs = [jnp.zeros((HO, WO), jnp.float32) + b_ref[co] for co in range(C_OUT)]

    # (ci, dy, dx) outer -> each shifted window is loaded exactly once and
    # reused across all output channels.
    for ci in range(C_IN):
        for dy in range(K):
            for dx in range(K):
                win = x_ref[ci, dy:dy + HO, dx:dx + WO]
                for co in range(C_OUT):
                    w = w_ref[((co * C_IN + ci) * K + dy) * K + dx]
                    accs[co] = accs[co] + w * win

    for co in range(C_OUT):
        out_ref[co, :, :] = accs[co] + add_ref[co, :, :]


def conv_add(x0, x1, weight, bias):
    """x0: [N, C_IN, H, W]; x1: [N, C_OUT, H-2, W-2]; weight: [C_OUT, C_IN, K, K]; bias: [C_OUT]."""
    N, C, H, W = x0.shape
    assert C == C_IN
    HO, WO = H - K + 1, W - K + 1
    assert x1.shape == (N, C_OUT, HO, WO)

    w_flat = weight.reshape(-1)

    return pl.pallas_call(
        conv_add_kernel,
        out_shape=jax.ShapeDtypeStruct((N, C_OUT, HO, WO), jnp.float32),
        grid=(N,),
        in_specs=[
            pl.BlockSpec((C_OUT * C_IN * K * K,), lambda n: (0,),
                         memory_space=pltpu.SMEM),
            pl.BlockSpec((C_OUT,), lambda n: (0,),
                         memory_space=pltpu.SMEM),
            pl.BlockSpec((None, C_IN, H, W), lambda n: (n, 0, 0, 0)),
            pl.BlockSpec((None, C_OUT, HO, WO), lambda n: (n, 0, 0, 0)),
        ],
        out_specs=pl.BlockSpec((None, C_OUT, HO, WO), lambda n: (n, 0, 0, 0)),
        compiler_params=pltpu.CompilerParams(
            dimension_semantics=("parallel",)),
    )(w_flat, bias, x0, x1)


if __name__ == "__main__":
    key = jax.random.PRNGKey(0)
    k_w, k_b, k_x0, k_x1 = jax.random.split(key, 4)

    # Deterministic parameter init matching torch.nn.Conv2d(3, 5, 3) defaults.
    fan_in = C_IN * K * K
    bound = 1.0 / jnp.sqrt(fan_in)
    weight = jax.random.uniform(k_w, (C_OUT, C_IN, K, K), jnp.float32,
                                minval=-bound, maxval=bound)
    bias = jax.random.uniform(k_b, (C_OUT,), jnp.float32,
                              minval=-bound, maxval=bound)

    # Inputs matching dummy_inputs(): rand [1,3,15,15] and rand [1,5,13,13].
    x0 = jax.random.uniform(k_x0, (1, 3, 15, 15), jnp.float32)
    x1 = jax.random.uniform(k_x1, (1, 5, 13, 13), jnp.float32)

    out = conv_add(x0, x1, weight, bias)
    out = jax.block_until_ready(out)

    # Reference check (plain JAX conv, valid padding).
    ref = jax.lax.conv_general_dilated(
        x0, weight, window_strides=(1, 1), padding="VALID",
        dimension_numbers=("NCHW", "OIHW", "NCHW"))
    ref = ref + bias[None, :, None, None] + x1

    assert out.shape == (1, 5, 13, 13)
    assert jnp.allclose(out, ref, atol=1e-5, rtol=1e-5)
    print("KERNEL_OK")
</pallas_src>

<mosaic_0001>
module attributes {stable_mosaic.version = 11 : i64} {
  func.func @conv_add_kernel(%arg0: i32, %arg1: memref<135xf32, #tpu.memory_space<smem>>, %arg2: memref<5xf32, #tpu.memory_space<smem>>, %arg3: memref<1x3x15x15xf32, #tpu.memory_space<vmem>>, %arg4: memref<1x5x13x13xf32, #tpu.memory_space<vmem>>, %arg5: memref<1x5x13x13xf32, #tpu.memory_space<vmem>>) attributes {dimension_semantics = [#tpu.dimension_semantics<parallel>], iteration_bounds = array<i64: 1>, scalar_prefetch = 0 : i64, scratch_operands = 0 : i64, tpu.core_type = #tpu.core_type<tc>, window_params = [{transform_indices = @transform_0, window_bounds = array<i64: 135>}, {transform_indices = @transform_1, window_bounds = array<i64: 5>}, {transform_indices = @transform_2, window_bounds = array<i64: 1, 3, 15, 15>}, {transform_indices = @transform_3, window_bounds = array<i64: 1, 5, 13, 13>}, {transform_indices = @transform_4, window_bounds = array<i64: 1, 5, 13, 13>}]} {
    %cst = arith.constant 0.000000e+00 : f32
    %0 = vector.broadcast %cst : f32 to vector<13x13xf32>
    %c0 = arith.constant 0 : index
    %1 = memref.load %arg2[%c0] : memref<5xf32, #tpu.memory_space<smem>>
    %2 = vector.broadcast %1 : f32 to vector<13x13xf32>
    %3 = arith.addf %0, %2 : vector<13x13xf32>
    %cst_0 = arith.constant 0.000000e+00 : f32
    %4 = vector.broadcast %cst_0 : f32 to vector<13x13xf32>
    %c1 = arith.constant 1 : index
    %5 = memref.load %arg2[%c1] : memref<5xf32, #tpu.memory_space<smem>>
    %6 = vector.broadcast %5 : f32 to vector<13x13xf32>
    %7 = arith.addf %4, %6 : vector<13x13xf32>
    %cst_1 = arith.constant 0.000000e+00 : f32
    %8 = vector.broadcast %cst_1 : f32 to vector<13x13xf32>
    %c2 = arith.constant 2 : index
    %9 = memref.load %arg2[%c2] : memref<5xf32, #tpu.memory_space<smem>>
    %10 = vector.broadcast %9 : f32 to vector<13x13xf32>
    %11 = arith.addf %8, %10 : vector<13x13xf32>
    %cst_2 = arith.constant 0.000000e+00 : f32
    %12 = vector.broadcast %cst_2 : f32 to vector<13x13xf32>
    %c3 = arith.constant 3 : index
    %13 = memref.load %arg2[%c3] : memref<5xf32, #tpu.memory_space<smem>>
    %14 = vector.broadcast %13 : f32 to vector<13x13xf32>
    %15 = arith.addf %12, %14 : vector<13x13xf32>
    %cst_3 = arith.constant 0.000000e+00 : f32
    %16 = vector.broadcast %cst_3 : f32 to vector<13x13xf32>
    %c4 = arith.constant 4 : index
    %17 = memref.load %arg2[%c4] : memref<5xf32, #tpu.memory_space<smem>>
    %18 = vector.broadcast %17 : f32 to vector<13x13xf32>
    %19 = arith.addf %16, %18 : vector<13x13xf32>
    %c0_4 = arith.constant 0 : index
    %c0_5 = arith.constant 0 : index
    %c0_6 = arith.constant 0 : index
    %c0_7 = arith.constant 0 : index
    %20 = vector.load %arg3[%c0_4, %c0_5, %c0_6, %c0_7] : memref<1x3x15x15xf32, #tpu.memory_space<vmem>>, vector<1x1x13x13xf32>
    %21 = vector.shape_cast %20 : vector<1x1x13x13xf32> to vector<13x13xf32>
    %c0_8 = arith.constant 0 : index
    %22 = memref.load %arg1[%c0_8] : memref<135xf32, #tpu.memory_space<smem>>
    %23 = vector.broadcast %22 : f32 to vector<13x13xf32>
    %24 = arith.mulf %23, %21 : vector<13x13xf32>
    %25 = arith.addf %3, %24 : vector<13x13xf32>
    %c27 = arith.constant 27 : index
    %26 = memref.load %arg1[%c27] : memref<135xf32, #tpu.memory_space<smem>>
    %27 = vector.broadcast %26 : f32 to vector<13x13xf32>
    %28 = arith.mulf %27, %21 : vector<13x13xf32>
    %29 = arith.addf %7, %28 : vector<13x13xf32>
    %c54 = arith.constant 54 : index
    %30 = memref.load %arg1[%c54] : memref<135xf32, #tpu.memory_space<smem>>
    %31 = vector.broadcast %30 : f32 to vector<13x13xf32>
    %32 = arith.mulf %31, %21 : vector<13x13xf32>
    %33 = arith.addf %11, %32 : vector<13x13xf32>
    %c81 = arith.constant 81 : index
    %34 = memref.load %arg1[%c81] : memref<135xf32, #tpu.memory_space<smem>>
    %35 = vector.broadcast %34 : f32 to vector<13x13xf32>
    %36 = arith.mulf %35, %21 : vector<13x13xf32>
    %37 = arith.addf %15, %36 : vector<13x13xf32>
    %c108 = arith.constant 108 : index
    %38 = memref.load %arg1[%c108] : memref<135xf32, #tpu.memory_space<smem>>
    %39 = vector.broadcast %38 : f32 to vector<13x13xf32>
    %40 = arith.mulf %39, %21 : vector<13x13xf32>
    %41 = arith.addf %19, %40 : vector<13x13xf32>
    %c0_9 = arith.constant 0 : index
    %c0_10 = arith.constant 0 : index
    %c0_11 = arith.constant 0 : index
    %c1_12 = arith.constant 1 : index
    %42 = vector.load %arg3[%c0_9, %c0_10, %c0_11, %c1_12] : memref<1x3x15x15xf32, #tpu.memory_space<vmem>>, vector<1x1x13x13xf32>
    %43 = vector.shape_cast %42 : vector<1x1x13x13xf32> to vector<13x13xf32>
    %c1_13 = arith.constant 1 : index
    %44 = memref.load %arg1[%c1_13] : memref<135xf32, #tpu.memory_space<smem>>
    %45 = vector.broadcast %44 : f32 to vector<13x13xf32>
    %46 = arith.mulf %45, %43 : vector<13x13xf32>
    %47 = arith.addf %25, %46 : vector<13x13xf32>
    %c28 = arith.constant 28 : index
    %48 = memref.load %arg1[%c28] : memref<135xf32, #tpu.memory_space<smem>>
    %49 = vector.broadcast %48 : f32 to vector<13x13xf32>
    %50 = arith.mulf %49, %43 : vector<13x13xf32>
    %51 = arith.addf %29, %50 : vector<13x13xf32>
    %c55 = arith.constant 55 : index
    %52 = memref.load %arg1[%c55] : memref<135xf32, #tpu.memory_space<smem>>
    %53 = vector.broadcast %52 : f32 to vector<13x13xf32>
    %54 = arith.mulf %53, %43 : vector<13x13xf32>
    %55 = arith.addf %33, %54 : vector<13x13xf32>
    %c82 = arith.constant 82 : index
    %56 = memref.load %arg1[%c82] : memref<135xf32, #tpu.memory_space<smem>>
    %57 = vector.broadcast %56 : f32 to vector<13x13xf32>
    %58 = arith.mulf %57, %43 : vector<13x13xf32>
    %59 = arith.addf %37, %58 : vector<13x13xf32>
    %c109 = arith.constant 109 : index
    %60 = memref.load %arg1[%c109] : memref<135xf32, #tpu.memory_space<smem>>
    %61 = vector.broadcast %60 : f32 to vector<13x13xf32>
    %62 = arith.mulf %61, %43 : vector<13x13xf32>
    %63 = arith.addf %41, %62 : vector<13x13xf32>
    %c0_14 = arith.constant 0 : index
    %c0_15 = arith.constant 0 : index
    %c0_16 = arith.constant 0 : index
    %c2_17 = arith.constant 2 : index
    %64 = vector.load %arg3[%c0_14, %c0_15, %c0_16, %c2_17] : memref<1x3x15x15xf32, #tpu.memory_space<vmem>>, vector<1x1x13x13xf32>
    %65 = vector.shape_cast %64 : vector<1x1x13x13xf32> to vector<13x13xf32>
    %c2_18 = arith.constant 2 : index
    %66 = memref.load %arg1[%c2_18] : memref<135xf32, #tpu.memory_space<smem>>
    %67 = vector.broadcast %66 : f32 to vector<13x13xf32>
    %68 = arith.mulf %67, %65 : vector<13x13xf32>
    %69 = arith.addf %47, %68 : vector<13x13xf32>
    %c29 = arith.constant 29 : index
    %70 = memref.load %arg1[%c29] : memref<135xf32, #tpu.memory_space<smem>>
    %71 = vector.broadcast %70 : f32 to vector<13x13xf32>
    %72 = arith.mulf %71, %65 : vector<13x13xf32>
    %73 = arith.addf %51, %72 : vector<13x13xf32>
    %c56 = arith.constant 56 : index
    %74 = memref.load %arg1[%c56] : memref<135xf32, #tpu.memory_space<smem>>
    %75 = vector.broadcast %74 : f32 to vector<13x13xf32>
    %76 = arith.mulf %75, %65 : vector<13x13xf32>
    %77 = arith.addf %55, %76 : vector<13x13xf32>
    %c83 = arith.constant 83 : index
    %78 = memref.load %arg1[%c83] : memref<135xf32, #tpu.memory_space<smem>>
    %79 = vector.broadcast %78 : f32 to vector<13x13xf32>
    %80 = arith.mulf %79, %65 : vector<13x13xf32>
    %81 = arith.addf %59, %80 : vector<13x13xf32>
    %c110 = arith.constant 110 : index
    %82 = memref.load %arg1[%c110] : memref<135xf32, #tpu.memory_space<smem>>
    %83 = vector.broadcast %82 : f32 to vector<13x13xf32>
    %84 = arith.mulf %83, %65 : vector<13x13xf32>
    %85 = arith.addf %63, %84 : vector<13x13xf32>
    %c0_19 = arith.constant 0 : index
    %c0_20 = arith.constant 0 : index
    %c1_21 = arith.constant 1 : index
    %c0_22 = arith.constant 0 : index
    %86 = vector.load %arg3[%c0_19, %c0_20, %c1_21, %c0_22] : memref<1x3x15x15xf32, #tpu.memory_space<vmem>>, vector<1x1x13x13xf32>
    %87 = vector.shape_cast %86 : vector<1x1x13x13xf32> to vector<13x13xf32>
    %c3_23 = arith.constant 3 : index
    %88 = memref.load %arg1[%c3_23] : memref<135xf32, #tpu.memory_space<smem>>
    %89 = vector.broadcast %88 : f32 to vector<13x13xf32>
    %90 = arith.mulf %89, %87 : vector<13x13xf32>
    %91 = arith.addf %69, %90 : vector<13x13xf32>
    %c30 = arith.constant 30 : index
    %92 = memref.load %arg1[%c30] : memref<135xf32, #tpu.memory_space<smem>>
    %93 = vector.broadcast %92 : f32 to vector<13x13xf32>
    %94 = arith.mulf %93, %87 : vector<13x13xf32>
    %95 = arith.addf %73, %94 : vector<13x13xf32>
    %c57 = arith.constant 57 : index
    %96 = memref.load %arg1[%c57] : memref<135xf32, #tpu.memory_space<smem>>
    %97 = vector.broadcast %96 : f32 to vector<13x13xf32>
    %98 = arith.mulf %97, %87 : vector<13x13xf32>
    %99 = arith.addf %77, %98 : vector<13x13xf32>
    %c84 = arith.constant 84 : index
    %100 = memref.load %arg1[%c84] : memref<135xf32, #tpu.memory_space<smem>>
    %101 = vector.broadcast %100 : f32 to vector<13x13xf32>
    %102 = arith.mulf %101, %87 : vector<13x13xf32>
    %103 = arith.addf %81, %102 : vector<13x13xf32>
    %c111 = arith.constant 111 : index
    %104 = memref.load %arg1[%c111] : memref<135xf32, #tpu.memory_space<smem>>
    %105 = vector.broadcast %104 : f32 to vector<13x13xf32>
    %106 = arith.mulf %105, %87 : vector<13x13xf32>
    %107 = arith.addf %85, %106 : vector<13x13xf32>
    %c0_24 = arith.constant 0 : index
    %c0_25 = arith.constant 0 : index
    %c1_26 = arith.constant 1 : index
    %c1_27 = arith.constant 1 : index
    %108 = vector.load %arg3[%c0_24, %c0_25, %c1_26, %c1_27] : memref<1x3x15x15xf32, #tpu.memory_space<vmem>>, vector<1x1x13x13xf32>
    %109 = vector.shape_cast %108 : vector<1x1x13x13xf32> to vector<13x13xf32>
    %c4_28 = arith.constant 4 : index
    %110 = memref.load %arg1[%c4_28] : memref<135xf32, #tpu.memory_space<smem>>
    %111 = vector.broadcast %110 : f32 to vector<13x13xf32>
    %112 = arith.mulf %111, %109 : vector<13x13xf32>
    %113 = arith.addf %91, %112 : vector<13x13xf32>
    %c31 = arith.constant 31 : index
    %114 = memref.load %arg1[%c31] : memref<135xf32, #tpu.memory_space<smem>>
    %115 = vector.broadcast %114 : f32 to vector<13x13xf32>
    %116 = arith.mulf %115, %109 : vector<13x13xf32>
    %117 = arith.addf %95, %116 : vector<13x13xf32>
    %c58 = arith.constant 58 : index
    %118 = memref.load %arg1[%c58] : memref<135xf32, #tpu.memory_space<smem>>
    %119 = vector.broadcast %118 : f32 to vector<13x13xf32>
    %120 = arith.mulf %119, %109 : vector<13x13xf32>
    %121 = arith.addf %99, %120 : vector<13x13xf32>
    %c85 = arith.constant 85 : index
    %122 = memref.load %arg1[%c85] : memref<135xf32, #tpu.memory_space<smem>>
    %123 = vector.broadcast %122 : f32 to vector<13x13xf32>
    %124 = arith.mulf %123, %109 : vector<13x13xf32>
    %125 = arith.addf %103, %124 : vector<13x13xf32>
    %c112 = arith.constant 112 : index
    %126 = memref.load %arg1[%c112] : memref<135xf32, #tpu.memory_space<smem>>
    %127 = vector.broadcast %126 : f32 to vector<13x13xf32>
    %128 = arith.mulf %127, %109 : vector<13x13xf32>
    %129 = arith.addf %107, %128 : vector<13x13xf32>
    %c0_29 = arith.constant 0 : index
    %c0_30 = arith.constant 0 : index
    %c1_31 = arith.constant 1 : index
    %c2_32 = arith.constant 2 : index
    %130 = vector.load %arg3[%c0_29, %c0_30, %c1_31, %c2_32] : memref<1x3x15x15xf32, #tpu.memory_space<vmem>>, vector<1x1x13x13xf32>
    %131 = vector.shape_cast %130 : vector<1x1x13x13xf32> to vector<13x13xf32>
    %c5 = arith.constant 5 : index
    %132 = memref.load %arg1[%c5] : memref<135xf32, #tpu.memory_space<smem>>
    %133 = vector.broadcast %132 : f32 to vector<13x13xf32>
    %134 = arith.mulf %133, %131 : vector<13x13xf32>
    %135 = arith.addf %113, %134 : vector<13x13xf32>
    %c32 = arith.constant 32 : index
    %136 = memref.load %arg1[%c32] : memref<135xf32, #tpu.memory_space<smem>>
    %137 = vector.broadcast %136 : f32 to vector<13x13xf32>
    %138 = arith.mulf %137, %131 : vector<13x13xf32>
    %139 = arith.addf %117, %138 : vector<13x13xf32>
    %c59 = arith.constant 59 : index
    %140 = memref.load %arg1[%c59] : memref<135xf32, #tpu.memory_space<smem>>
    %141 = vector.broadcast %140 : f32 to vector<13x13xf32>
    %142 = arith.mulf %141, %131 : vector<13x13xf32>
    %143 = arith.addf %121, %142 : vector<13x13xf32>
    %c86 = arith.constant 86 : index
    %144 = memref.load %arg1[%c86] : memref<135xf32, #tpu.memory_space<smem>>
    %145 = vector.broadcast %144 : f32 to vector<13x13xf32>
    %146 = arith.mulf %145, %131 : vector<13x13xf32>
    %147 = arith.addf %125, %146 : vector<13x13xf32>
    %c113 = arith.constant 113 : index
    %148 = memref.load %arg1[%c113] : memref<135xf32, #tpu.memory_space<smem>>
    %149 = vector.broadcast %148 : f32 to vector<13x13xf32>
    %150 = arith.mulf %149, %131 : vector<13x13xf32>
    %151 = arith.addf %129, %150 : vector<13x13xf32>
    %c0_33 = arith.constant 0 : index
    %c0_34 = arith.constant 0 : index
    %c2_35 = arith.constant 2 : index
    %c0_36 = arith.constant 0 : index
    %152 = vector.load %arg3[%c0_33, %c0_34, %c2_35, %c0_36] : memref<1x3x15x15xf32, #tpu.memory_space<vmem>>, vector<1x1x13x13xf32>
    %153 = vector.shape_cast %152 : vector<1x1x13x13xf32> to vector<13x13xf32>
    %c6 = arith.constant 6 : index
    %154 = memref.load %arg1[%c6] : memref<135xf32, #tpu.memory_space<smem>>
    %155 = vector.broadcast %154 : f32 to vector<13x13xf32>
    %156 = arith.mulf %155, %153 : vector<13x13xf32>
    %157 = arith.addf %135, %156 : vector<13x13xf32>
    %c33 = arith.constant 33 : index
    %158 = memref.load %arg1[%c33] : memref<135xf32, #tpu.memory_space<smem>>
    %159 = vector.broadcast %158 : f32 to vector<13x13xf32>
    %160 = arith.mulf %159, %153 : vector<13x13xf32>
    %161 = arith.addf %139, %160 : vector<13x13xf32>
    %c60 = arith.constant 60 : index
    %162 = memref.load %arg1[%c60] : memref<135xf32, #tpu.memory_space<smem>>
    %163 = vector.broadcast %162 : f32 to vector<13x13xf32>
    %164 = arith.mulf %163, %153 : vector<13x13xf32>
    %165 = arith.addf %143, %164 : vector<13x13xf32>
    %c87 = arith.constant 87 : index
    %166 = memref.load %arg1[%c87] : memref<135xf32, #tpu.memory_space<smem>>
    %167 = vector.broadcast %166 : f32 to vector<13x13xf32>
    %168 = arith.mulf %167, %153 : vector<13x13xf32>
    %169 = arith.addf %147, %168 : vector<13x13xf32>
    %c114 = arith.constant 114 : index
    %170 = memref.load %arg1[%c114] : memref<135xf32, #tpu.memory_space<smem>>
    %171 = vector.broadcast %170 : f32 to vector<13x13xf32>
    %172 = arith.mulf %171, %153 : vector<13x13xf32>
    %173 = arith.addf %151, %172 : vector<13x13xf32>
    %c0_37 = arith.constant 0 : index
    %c0_38 = arith.constant 0 : index
    %c2_39 = arith.constant 2 : index
    %c1_40 = arith.constant 1 : index
    %174 = vector.load %arg3[%c0_37, %c0_38, %c2_39, %c1_40] : memref<1x3x15x15xf32, #tpu.memory_space<vmem>>, vector<1x1x13x13xf32>
    %175 = vector.shape_cast %174 : vector<1x1x13x13xf32> to vector<13x13xf32>
    %c7 = arith.constant 7 : index
    %176 = memref.load %arg1[%c7] : memref<135xf32, #tpu.memory_space<smem>>
    %177 = vector.broadcast %176 : f32 to vector<13x13xf32>
    %178 = arith.mulf %177, %175 : vector<13x13xf32>
    %179 = arith.addf %157, %178 : vector<13x13xf32>
    %c34 = arith.constant 34 : index
    %180 = memref.load %arg1[%c34] : memref<135xf32, #tpu.memory_space<smem>>
    %181 = vector.broadcast %180 : f32 to vector<13x13xf32>
    %182 = arith.mulf %181, %175 : vector<13x13xf32>
    %183 = arith.addf %161, %182 : vector<13x13xf32>
    %c61 = arith.constant 61 : index
    %184 = memref.load %arg1[%c61] : memref<135xf32, #tpu.memory_space<smem>>
    %185 = vector.broadcast %184 : f32 to vector<13x13xf32>
    %186 = arith.mulf %185, %175 : vector<13x13xf32>
    %187 = arith.addf %165, %186 : vector<13x13xf32>
    %c88 = arith.constant 88 : index
    %188 = memref.load %arg1[%c88] : memref<135xf32, #tpu.memory_space<smem>>
    %189 = vector.broadcast %188 : f32 to vector<13x13xf32>
    %190 = arith.mulf %189, %175 : vector<13x13xf32>
    %191 = arith.addf %169, %190 : vector<13x13xf32>
    %c115 = arith.constant 115 : index
    %192 = memref.load %arg1[%c115] : memref<135xf32, #tpu.memory_space<smem>>
    %193 = vector.broadcast %192 : f32 to vector<13x13xf32>
    %194 = arith.mulf %193, %175 : vector<13x13xf32>
    %195 = arith.addf %173, %194 : vector<13x13xf32>
    %c0_41 = arith.constant 0 : index
    %c0_42 = arith.constant 0 : index
    %c2_43 = arith.constant 2 : index
    %c2_44 = arith.constant 2 : index
    %196 = vector.load %arg3[%c0_41, %c0_42, %c2_43, %c2_44] : memref<1x3x15x15xf32, #tpu.memory_space<vmem>>, vector<1x1x13x13xf32>
    %197 = vector.shape_cast %196 : vector<1x1x13x13xf32> to vector<13x13xf32>
    %c8 = arith.constant 8 : index
    %198 = memref.load %arg1[%c8] : memref<135xf32, #tpu.memory_space<smem>>
    %199 = vector.broadcast %198 : f32 to vector<13x13xf32>
    %200 = arith.mulf %199, %197 : vector<13x13xf32>
    %201 = arith.addf %179, %200 : vector<13x13xf32>
    %c35 = arith.constant 35 : index
    %202 = memref.load %arg1[%c35] : memref<135xf32, #tpu.memory_space<smem>>
    %203 = vector.broadcast %202 : f32 to vector<13x13xf32>
    %204 = arith.mulf %203, %197 : vector<13x13xf32>
    %205 = arith.addf %183, %204 : vector<13x13xf32>
    %c62 = arith.constant 62 : index
    %206 = memref.load %arg1[%c62] : memref<135xf32, #tpu.memory_space<smem>>
    %207 = vector.broadcast %206 : f32 to vector<13x13xf32>
    %208 = arith.mulf %207, %197 : vector<13x13xf32>
    %209 = arith.addf %187, %208 : vector<13x13xf32>
    %c89 = arith.constant 89 : index
    %210 = memref.load %arg1[%c89] : memref<135xf32, #tpu.memory_space<smem>>
    %211 = vector.broadcast %210 : f32 to vector<13x13xf32>
    %212 = arith.mulf %211, %197 : vector<13x13xf32>
    %213 = arith.addf %191, %212 : vector<13x13xf32>
    %c116 = arith.constant 116 : index
    %214 = memref.load %arg1[%c116] : memref<135xf32, #tpu.memory_space<smem>>
    %215 = vector.broadcast %214 : f32 to vector<13x13xf32>
    %216 = arith.mulf %215, %197 : vector<13x13xf32>
    %217 = arith.addf %195, %216 : vector<13x13xf32>
    %c0_45 = arith.constant 0 : index
    %c1_46 = arith.constant 1 : index
    %c0_47 = arith.constant 0 : index
    %c0_48 = arith.constant 0 : index
    %218 = vector.load %arg3[%c0_45, %c1_46, %c0_47, %c0_48] : memref<1x3x15x15xf32, #tpu.memory_space<vmem>>, vector<1x1x13x13xf32>
    %219 = vector.shape_cast %218 : vector<1x1x13x13xf32> to vector<13x13xf32>
    %c9 = arith.constant 9 : index
    %220 = memref.load %arg1[%c9] : memref<135xf32, #tpu.memory_space<smem>>
    %221 = vector.broadcast %220 : f32 to vector<13x13xf32>
    %222 = arith.mulf %221, %219 : vector<13x13xf32>
    %223 = arith.addf %201, %222 : vector<13x13xf32>
    %c36 = arith.constant 36 : index
    %224 = memref.load %arg1[%c36] : memref<135xf32, #tpu.memory_space<smem>>
    %225 = vector.broadcast %224 : f32 to vector<13x13xf32>
    %226 = arith.mulf %225, %219 : vector<13x13xf32>
    %227 = arith.addf %205, %226 : vector<13x13xf32>
    %c63 = arith.constant 63 : index
    %228 = memref.load %arg1[%c63] : memref<135xf32, #tpu.memory_space<smem>>
    %229 = vector.broadcast %228 : f32 to vector<13x13xf32>
    %230 = arith.mulf %229, %219 : vector<13x13xf32>
    %231 = arith.addf %209, %230 : vector<13x13xf32>
    %c90 = arith.constant 90 : index
    %232 = memref.load %arg1[%c90] : memref<135xf32, #tpu.memory_space<smem>>
    %233 = vector.broadcast %232 : f32 to vector<13x13xf32>
    %234 = arith.mulf %233, %219 : vector<13x13xf32>
    %235 = arith.addf %213, %234 : vector<13x13xf32>
    %c117 = arith.constant 117 : index
    %236 = memref.load %arg1[%c117] : memref<135xf32, #tpu.memory_space<smem>>
    %237 = vector.broadcast %236 : f32 to vector<13x13xf32>
    %238 = arith.mulf %237, %219 : vector<13x13xf32>
    %239 = arith.addf %217, %238 : vector<13x13xf32>
    %c0_49 = arith.constant 0 : index
    %c1_50 = arith.constant 1 : index
    %c0_51 = arith.constant 0 : index
    %c1_52 = arith.constant 1 : index
    %240 = vector.load %arg3[%c0_49, %c1_50, %c0_51, %c1_52] : memref<1x3x15x15xf32, #tpu.memory_space<vmem>>, vector<1x1x13x13xf32>
    %241 = vector.shape_cast %240 : vector<1x1x13x13xf32> to vector<13x13xf32>
    %c10 = arith.constant 10 : index
    %242 = memref.load %arg1[%c10] : memref<135xf32, #tpu.memory_space<smem>>
    %243 = vector.broadcast %242 : f32 to vector<13x13xf32>
    %244 = arith.mulf %243, %241 : vector<13x13xf32>
    %245 = arith.addf %223, %244 : vector<13x13xf32>
    %c37 = arith.constant 37 : index
    %246 = memref.load %arg1[%c37] : memref<135xf32, #tpu.memory_space<smem>>
    %247 = vector.broadcast %246 : f32 to vector<13x13xf32>
    %248 = arith.mulf %247, %241 : vector<13x13xf32>
    %249 = arith.addf %227, %248 : vector<13x13xf32>
    %c64 = arith.constant 64 : index
    %250 = memref.load %arg1[%c64] : memref<135xf32, #tpu.memory_space<smem>>
    %251 = vector.broadcast %250 : f32 to vector<13x13xf32>
    %252 = arith.mulf %251, %241 : vector<13x13xf32>
    %253 = arith.addf %231, %252 : vector<13x13xf32>
    %c91 = arith.constant 91 : index
    %254 = memref.load %arg1[%c91] : memref<135xf32, #tpu.memory_space<smem>>
    %255 = vector.broadcast %254 : f32 to vector<13x13xf32>
    %256 = arith.mulf %255, %241 : vector<13x13xf32>
    %257 = arith.addf %235, %256 : vector<13x13xf32>
    %c118 = arith.constant 118 : index
    %258 = memref.load %arg1[%c118] : memref<135xf32, #tpu.memory_space<smem>>
    %259 = vector.broadcast %258 : f32 to vector<13x13xf32>
    %260 = arith.mulf %259, %241 : vector<13x13xf32>
    %261 = arith.addf %239, %260 : vector<13x13xf32>
    %c0_53 = arith.constant 0 : index
    %c1_54 = arith.constant 1 : index
    %c0_55 = arith.constant 0 : index
    %c2_56 = arith.constant 2 : index
    %262 = vector.load %arg3[%c0_53, %c1_54, %c0_55, %c2_56] : memref<1x3x15x15xf32, #tpu.memory_space<vmem>>, vector<1x1x13x13xf32>
    %263 = vector.shape_cast %262 : vector<1x1x13x13xf32> to vector<13x13xf32>
    %c11 = arith.constant 11 : index
    %264 = memref.load %arg1[%c11] : memref<135xf32, #tpu.memory_space<smem>>
    %265 = vector.broadcast %264 : f32 to vector<13x13xf32>
    %266 = arith.mulf %265, %263 : vector<13x13xf32>
    %267 = arith.addf %245, %266 : vector<13x13xf32>
    %c38 = arith.constant 38 : index
    %268 = memref.load %arg1[%c38] : memref<135xf32, #tpu.memory_space<smem>>
    %269 = vector.broadcast %268 : f32 to vector<13x13xf32>
    %270 = arith.mulf %269, %263 : vector<13x13xf32>
    %271 = arith.addf %249, %270 : vector<13x13xf32>
    %c65 = arith.constant 65 : index
    %272 = memref.load %arg1[%c65] : memref<135xf32, #tpu.memory_space<smem>>
    %273 = vector.broadcast %272 : f32 to vector<13x13xf32>
    %274 = arith.mulf %273, %263 : vector<13x13xf32>
    %275 = arith.addf %253, %274 : vector<13x13xf32>
    %c92 = arith.constant 92 : index
    %276 = memref.load %arg1[%c92] : memref<135xf32, #tpu.memory_space<smem>>
    %277 = vector.broadcast %276 : f32 to vector<13x13xf32>
    %278 = arith.mulf %277, %263 : vector<13x13xf32>
    %279 = arith.addf %257, %278 : vector<13x13xf32>
    %c119 = arith.constant 119 : index
    %280 = memref.load %arg1[%c119] : memref<135xf32, #tpu.memory_space<smem>>
    %281 = vector.broadcast %280 : f32 to vector<13x13xf32>
    %282 = arith.mulf %281, %263 : vector<13x13xf32>
    %283 = arith.addf %261, %282 : vector<13x13xf32>
    %c0_57 = arith.constant 0 : index
    %c1_58 = arith.constant 1 : index
    %c1_59 = arith.constant 1 : index
    %c0_60 = arith.constant 0 : index
    %284 = vector.load %arg3[%c0_57, %c1_58, %c1_59, %c0_60] : memref<1x3x15x15xf32, #tpu.memory_space<vmem>>, vector<1x1x13x13xf32>
    %285 = vector.shape_cast %284 : vector<1x1x13x13xf32> to vector<13x13xf32>
    %c12 = arith.constant 12 : index
    %286 = memref.load %arg1[%c12] : memref<135xf32, #tpu.memory_space<smem>>
    %287 = vector.broadcast %286 : f32 to vector<13x13xf32>
    %288 = arith.mulf %287, %285 : vector<13x13xf32>
    %289 = arith.addf %267, %288 : vector<13x13xf32>
    %c39 = arith.constant 39 : index
    %290 = memref.load %arg1[%c39] : memref<135xf32, #tpu.memory_space<smem>>
    %291 = vector.broadcast %290 : f32 to vector<13x13xf32>
    %292 = arith.mulf %291, %285 : vector<13x13xf32>
    %293 = arith.addf %271, %292 : vector<13x13xf32>
    %c66 = arith.constant 66 : index
    %294 = memref.load %arg1[%c66] : memref<135xf32, #tpu.memory_space<smem>>
    %295 = vector.broadcast %294 : f32 to vector<13x13xf32>
    %296 = arith.mulf %295, %285 : vector<13x13xf32>
    %297 = arith.addf %275, %296 : vector<13x13xf32>
    %c93 = arith.constant 93 : index
    %298 = memref.load %arg1[%c93] : memref<135xf32, #tpu.memory_space<smem>>
    %299 = vector.broadcast %298 : f32 to vector<13x13xf32>
    %300 = arith.mulf %299, %285 : vector<13x13xf32>
    %301 = arith.addf %279, %300 : vector<13x13xf32>
    %c120 = arith.constant 120 : index
    %302 = memref.load %arg1[%c120] : memref<135xf32, #tpu.memory_space<smem>>
    %303 = vector.broadcast %302 : f32 to vector<13x13xf32>
    %304 = arith.mulf %303, %285 : vector<13x13xf32>
    %305 = arith.addf %283, %304 : vector<13x13xf32>
    %c0_61 = arith.constant 0 : index
    %c1_62 = arith.constant 1 : index
    %c1_63 = arith.constant 1 : index
    %c1_64 = arith.constant 1 : index
    %306 = vector.load %arg3[%c0_61, %c1_62, %c1_63, %c1_64] : memref<1x3x15x15xf32, #tpu.memory_space<vmem>>, vector<1x1x13x13xf32>
    %307 = vector.shape_cast %306 : vector<1x1x13x13xf32> to vector<13x13xf32>
    %c13 = arith.constant 13 : index
    %308 = memref.load %arg1[%c13] : memref<135xf32, #tpu.memory_space<smem>>
    %309 = vector.broadcast %308 : f32 to vector<13x13xf32>
    %310 = arith.mulf %309, %307 : vector<13x13xf32>
    %311 = arith.addf %289, %310 : vector<13x13xf32>
    %c40 = arith.constant 40 : index
    %312 = memref.load %arg1[%c40] : memref<135xf32, #tpu.memory_space<smem>>
    %313 = vector.broadcast %312 : f32 to vector<13x13xf32>
    %314 = arith.mulf %313, %307 : vector<13x13xf32>
    %315 = arith.addf %293, %314 : vector<13x13xf32>
    %c67 = arith.constant 67 : index
    %316 = memref.load %arg1[%c67] : memref<135xf32, #tpu.memory_space<smem>>
    %317 = vector.broadcast %316 : f32 to vector<13x13xf32>
    %318 = arith.mulf %317, %307 : vector<13x13xf32>
    %319 = arith.addf %297, %318 : vector<13x13xf32>
    %c94 = arith.constant 94 : index
    %320 = memref.load %arg1[%c94] : memref<135xf32, #tpu.memory_space<smem>>
    %321 = vector.broadcast %320 : f32 to vector<13x13xf32>
    %322 = arith.mulf %321, %307 : vector<13x13xf32>
    %323 = arith.addf %301, %322 : vector<13x13xf32>
    %c121 = arith.constant 121 : index
    %324 = memref.load %arg1[%c121] : memref<135xf32, #tpu.memory_space<smem>>
    %325 = vector.broadcast %324 : f32 to vector<13x13xf32>
    %326 = arith.mulf %325, %307 : vector<13x13xf32>
    %327 = arith.addf %305, %326 : vector<13x13xf32>
    %c0_65 = arith.constant 0 : index
    %c1_66 = arith.constant 1 : index
    %c1_67 = arith.constant 1 : index
    %c2_68 = arith.constant 2 : index
    %328 = vector.load %arg3[%c0_65, %c1_66, %c1_67, %c2_68] : memref<1x3x15x15xf32, #tpu.memory_space<vmem>>, vector<1x1x13x13xf32>
    %329 = vector.shape_cast %328 : vector<1x1x13x13xf32> to vector<13x13xf32>
    %c14 = arith.constant 14 : index
    %330 = memref.load %arg1[%c14] : memref<135xf32, #tpu.memory_space<smem>>
    %331 = vector.broadcast %330 : f32 to vector<13x13xf32>
    %332 = arith.mulf %331, %329 : vector<13x13xf32>
    %333 = arith.addf %311, %332 : vector<13x13xf32>
    %c41 = arith.constant 41 : index
    %334 = memref.load %arg1[%c41] : memref<135xf32, #tpu.memory_space<smem>>
    %335 = vector.broadcast %334 : f32 to vector<13x13xf32>
    %336 = arith.mulf %335, %329 : vector<13x13xf32>
    %337 = arith.addf %315, %336 : vector<13x13xf32>
    %c68 = arith.constant 68 : index
    %338 = memref.load %arg1[%c68] : memref<135xf32, #tpu.memory_space<smem>>
    %339 = vector.broadcast %338 : f32 to vector<13x13xf32>
    %340 = arith.mulf %339, %329 : vector<13x13xf32>
    %341 = arith.addf %319, %340 : vector<13x13xf32>
    %c95 = arith.constant 95 : index
    %342 = memref.load %arg1[%c95] : memref<135xf32, #tpu.memory_space<smem>>
    %343 = vector.broadcast %342 : f32 to vector<13x13xf32>
    %344 = arith.mulf %343, %329 : vector<13x13xf32>
    %345 = arith.addf %323, %344 : vector<13x13xf32>
    %c122 = arith.constant 122 : index
    %346 = memref.load %arg1[%c122] : memref<135xf32, #tpu.memory_space<smem>>
    %347 = vector.broadcast %346 : f32 to vector<13x13xf32>
    %348 = arith.mulf %347, %329 : vector<13x13xf32>
    %349 = arith.addf %327, %348 : vector<13x13xf32>
    %c0_69 = arith.constant 0 : index
    %c1_70 = arith.constant 1 : index
    %c2_71 = arith.constant 2 : index
    %c0_72 = arith.constant 0 : index
    %350 = vector.load %arg3[%c0_69, %c1_70, %c2_71, %c0_72] : memref<1x3x15x15xf32, #tpu.memory_space<vmem>>, vector<1x1x13x13xf32>
    %351 = vector.shape_cast %350 : vector<1x1x13x13xf32> to vector<13x13xf32>
    %c15 = arith.constant 15 : index
    %352 = memref.load %arg1[%c15] : memref<135xf32, #tpu.memory_space<smem>>
    %353 = vector.broadcast %352 : f32 to vector<13x13xf32>
    %354 = arith.mulf %353, %351 : vector<13x13xf32>
    %355 = arith.addf %333, %354 : vector<13x13xf32>
    %c42 = arith.constant 42 : index
    %356 = memref.load %arg1[%c42] : memref<135xf32, #tpu.memory_space<smem>>
    %357 = vector.broadcast %356 : f32 to vector<13x13xf32>
    %358 = arith.mulf %357, %351 : vector<13x13xf32>
    %359 = arith.addf %337, %358 : vector<13x13xf32>
    %c69 = arith.constant 69 : index
    %360 = memref.load %arg1[%c69] : memref<135xf32, #tpu.memory_space<smem>>
    %361 = vector.broadcast %360 : f32 to vector<13x13xf32>
    %362 = arith.mulf %361, %351 : vector<13x13xf32>
    %363 = arith.addf %341, %362 : vector<13x13xf32>
    %c96 = arith.constant 96 : index
    %364 = memref.load %arg1[%c96] : memref<135xf32, #tpu.memory_space<smem>>
    %365 = vector.broadcast %364 : f32 to vector<13x13xf32>
    %366 = arith.mulf %365, %351 : vector<13x13xf32>
    %367 = arith.addf %345, %366 : vector<13x13xf32>
    %c123 = arith.constant 123 : index
    %368 = memref.load %arg1[%c123] : memref<135xf32, #tpu.memory_space<smem>>
    %369 = vector.broadcast %368 : f32 to vector<13x13xf32>
    %370 = arith.mulf %369, %351 : vector<13x13xf32>
    %371 = arith.addf %349, %370 : vector<13x13xf32>
    %c0_73 = arith.constant 0 : index
    %c1_74 = arith.constant 1 : index
    %c2_75 = arith.constant 2 : index
    %c1_76 = arith.constant 1 : index
    %372 = vector.load %arg3[%c0_73, %c1_74, %c2_75, %c1_76] : memref<1x3x15x15xf32, #tpu.memory_space<vmem>>, vector<1x1x13x13xf32>
    %373 = vector.shape_cast %372 : vector<1x1x13x13xf32> to vector<13x13xf32>
    %c16 = arith.constant 16 : index
    %374 = memref.load %arg1[%c16] : memref<135xf32, #tpu.memory_space<smem>>
    %375 = vector.broadcast %374 : f32 to vector<13x13xf32>
    %376 = arith.mulf %375, %373 : vector<13x13xf32>
    %377 = arith.addf %355, %376 : vector<13x13xf32>
    %c43 = arith.constant 43 : index
    %378 = memref.load %arg1[%c43] : memref<135xf32, #tpu.memory_space<smem>>
    %379 = vector.broadcast %378 : f32 to vector<13x13xf32>
    %380 = arith.mulf %379, %373 : vector<13x13xf32>
    %381 = arith.addf %359, %380 : vector<13x13xf32>
    %c70 = arith.constant 70 : index
    %382 = memref.load %arg1[%c70] : memref<135xf32, #tpu.memory_space<smem>>
    %383 = vector.broadcast %382 : f32 to vector<13x13xf32>
    %384 = arith.mulf %383, %373 : vector<13x13xf32>
    %385 = arith.addf %363, %384 : vector<13x13xf32>
    %c97 = arith.constant 97 : index
    %386 = memref.load %arg1[%c97] : memref<135xf32, #tpu.memory_space<smem>>
    %387 = vector.broadcast %386 : f32 to vector<13x13xf32>
    %388 = arith.mulf %387, %373 : vector<13x13xf32>
    %389 = arith.addf %367, %388 : vector<13x13xf32>
    %c124 = arith.constant 124 : index
    %390 = memref.load %arg1[%c124] : memref<135xf32, #tpu.memory_space<smem>>
    %391 = vector.broadcast %390 : f32 to vector<13x13xf32>
    %392 = arith.mulf %391, %373 : vector<13x13xf32>
    %393 = arith.addf %371, %392 : vector<13x13xf32>
    %c0_77 = arith.constant 0 : index
    %c1_78 = arith.constant 1 : index
    %c2_79 = arith.constant 2 : index
    %c2_80 = arith.constant 2 : index
    %394 = vector.load %arg3[%c0_77, %c1_78, %c2_79, %c2_80] : memref<1x3x15x15xf32, #tpu.memory_space<vmem>>, vector<1x1x13x13xf32>
    %395 = vector.shape_cast %394 : vector<1x1x13x13xf32> to vector<13x13xf32>
    %c17 = arith.constant 17 : index
    %396 = memref.load %arg1[%c17] : memref<135xf32, #tpu.memory_space<smem>>
    %397 = vector.broadcast %396 : f32 to vector<13x13xf32>
    %398 = arith.mulf %397, %395 : vector<13x13xf32>
    %399 = arith.addf %377, %398 : vector<13x13xf32>
    %c44 = arith.constant 44 : index
    %400 = memref.load %arg1[%c44] : memref<135xf32, #tpu.memory_space<smem>>
    %401 = vector.broadcast %400 : f32 to vector<13x13xf32>
    %402 = arith.mulf %401, %395 : vector<13x13xf32>
    %403 = arith.addf %381, %402 : vector<13x13xf32>
    %c71 = arith.constant 71 : index
    %404 = memref.load %arg1[%c71] : memref<135xf32, #tpu.memory_space<smem>>
    %405 = vector.broadcast %404 : f32 to vector<13x13xf32>
    %406 = arith.mulf %405, %395 : vector<13x13xf32>
    %407 = arith.addf %385, %406 : vector<13x13xf32>
    %c98 = arith.constant 98 : index
    %408 = memref.load %arg1[%c98] : memref<135xf32, #tpu.memory_space<smem>>
    %409 = vector.broadcast %408 : f32 to vector<13x13xf32>
    %410 = arith.mulf %409, %395 : vector<13x13xf32>
    %411 = arith.addf %389, %410 : vector<13x13xf32>
    %c125 = arith.constant 125 : index
    %412 = memref.load %arg1[%c125] : memref<135xf32, #tpu.memory_space<smem>>
    %413 = vector.broadcast %412 : f32 to vector<13x13xf32>
    %414 = arith.mulf %413, %395 : vector<13x13xf32>
    %415 = arith.addf %393, %414 : vector<13x13xf32>
    %c0_81 = arith.constant 0 : index
    %c2_82 = arith.constant 2 : index
    %c0_83 = arith.constant 0 : index
    %c0_84 = arith.constant 0 : index
    %416 = vector.load %arg3[%c0_81, %c2_82, %c0_83, %c0_84] : memref<1x3x15x15xf32, #tpu.memory_space<vmem>>, vector<1x1x13x13xf32>
    %417 = vector.shape_cast %416 : vector<1x1x13x13xf32> to vector<13x13xf32>
    %c18 = arith.constant 18 : index
    %418 = memref.load %arg1[%c18] : memref<135xf32, #tpu.memory_space<smem>>
    %419 = vector.broadcast %418 : f32 to vector<13x13xf32>
    %420 = arith.mulf %419, %417 : vector<13x13xf32>
    %421 = arith.addf %399, %420 : vector<13x13xf32>
    %c45 = arith.constant 45 : index
    %422 = memref.load %arg1[%c45] : memref<135xf32, #tpu.memory_space<smem>>
    %423 = vector.broadcast %422 : f32 to vector<13x13xf32>
    %424 = arith.mulf %423, %417 : vector<13x13xf32>
    %425 = arith.addf %403, %424 : vector<13x13xf32>
    %c72 = arith.constant 72 : index
    %426 = memref.load %arg1[%c72] : memref<135xf32, #tpu.memory_space<smem>>
    %427 = vector.broadcast %426 : f32 to vector<13x13xf32>
    %428 = arith.mulf %427, %417 : vector<13x13xf32>
    %429 = arith.addf %407, %428 : vector<13x13xf32>
    %c99 = arith.constant 99 : index
    %430 = memref.load %arg1[%c99] : memref<135xf32, #tpu.memory_space<smem>>
    %431 = vector.broadcast %430 : f32 to vector<13x13xf32>
    %432 = arith.mulf %431, %417 : vector<13x13xf32>
    %433 = arith.addf %411, %432 : vector<13x13xf32>
    %c126 = arith.constant 126 : index
    %434 = memref.load %arg1[%c126] : memref<135xf32, #tpu.memory_space<smem>>
    %435 = vector.broadcast %434 : f32 to vector<13x13xf32>
    %436 = arith.mulf %435, %417 : vector<13x13xf32>
    %437 = arith.addf %415, %436 : vector<13x13xf32>
    %c0_85 = arith.constant 0 : index
    %c2_86 = arith.constant 2 : index
    %c0_87 = arith.constant 0 : index
    %c1_88 = arith.constant 1 : index
    %438 = vector.load %arg3[%c0_85, %c2_86, %c0_87, %c1_88] : memref<1x3x15x15xf32, #tpu.memory_space<vmem>>, vector<1x1x13x13xf32>
    %439 = vector.shape_cast %438 : vector<1x1x13x13xf32> to vector<13x13xf32>
    %c19 = arith.constant 19 : index
    %440 = memref.load %arg1[%c19] : memref<135xf32, #tpu.memory_space<smem>>
    %441 = vector.broadcast %440 : f32 to vector<13x13xf32>
    %442 = arith.mulf %441, %439 : vector<13x13xf32>
    %443 = arith.addf %421, %442 : vector<13x13xf32>
    %c46 = arith.constant 46 : index
    %444 = memref.load %arg1[%c46] : memref<135xf32, #tpu.memory_space<smem>>
    %445 = vector.broadcast %444 : f32 to vector<13x13xf32>
    %446 = arith.mulf %445, %439 : vector<13x13xf32>
    %447 = arith.addf %425, %446 : vector<13x13xf32>
    %c73 = arith.constant 73 : index
    %448 = memref.load %arg1[%c73] : memref<135xf32, #tpu.memory_space<smem>>
    %449 = vector.broadcast %448 : f32 to vector<13x13xf32>
    %450 = arith.mulf %449, %439 : vector<13x13xf32>
    %451 = arith.addf %429, %450 : vector<13x13xf32>
    %c100 = arith.constant 100 : index
    %452 = memref.load %arg1[%c100] : memref<135xf32, #tpu.memory_space<smem>>
    %453 = vector.broadcast %452 : f32 to vector<13x13xf32>
    %454 = arith.mulf %453, %439 : vector<13x13xf32>
    %455 = arith.addf %433, %454 : vector<13x13xf32>
    %c127 = arith.constant 127 : index
    %456 = memref.load %arg1[%c127] : memref<135xf32, #tpu.memory_space<smem>>
    %457 = vector.broadcast %456 : f32 to vector<13x13xf32>
    %458 = arith.mulf %457, %439 : vector<13x13xf32>
    %459 = arith.addf %437, %458 : vector<13x13xf32>
    %c0_89 = arith.constant 0 : index
    %c2_90 = arith.constant 2 : index
    %c0_91 = arith.constant 0 : index
    %c2_92 = arith.constant 2 : index
    %460 = vector.load %arg3[%c0_89, %c2_90, %c0_91, %c2_92] : memref<1x3x15x15xf32, #tpu.memory_space<vmem>>, vector<1x1x13x13xf32>
    %461 = vector.shape_cast %460 : vector<1x1x13x13xf32> to vector<13x13xf32>
    %c20 = arith.constant 20 : index
    %462 = memref.load %arg1[%c20] : memref<135xf32, #tpu.memory_space<smem>>
    %463 = vector.broadcast %462 : f32 to vector<13x13xf32>
    %464 = arith.mulf %463, %461 : vector<13x13xf32>
    %465 = arith.addf %443, %464 : vector<13x13xf32>
    %c47 = arith.constant 47 : index
    %466 = memref.load %arg1[%c47] : memref<135xf32, #tpu.memory_space<smem>>
    %467 = vector.broadcast %466 : f32 to vector<13x13xf32>
    %468 = arith.mulf %467, %461 : vector<13x13xf32>
    %469 = arith.addf %447, %468 : vector<13x13xf32>
    %c74 = arith.constant 74 : index
    %470 = memref.load %arg1[%c74] : memref<135xf32, #tpu.memory_space<smem>>
    %471 = vector.broadcast %470 : f32 to vector<13x13xf32>
    %472 = arith.mulf %471, %461 : vector<13x13xf32>
    %473 = arith.addf %451, %472 : vector<13x13xf32>
    %c101 = arith.constant 101 : index
    %474 = memref.load %arg1[%c101] : memref<135xf32, #tpu.memory_space<smem>>
    %475 = vector.broadcast %474 : f32 to vector<13x13xf32>
    %476 = arith.mulf %475, %461 : vector<13x13xf32>
    %477 = arith.addf %455, %476 : vector<13x13xf32>
    %c128 = arith.constant 128 : index
    %478 = memref.load %arg1[%c128] : memref<135xf32, #tpu.memory_space<smem>>
    %479 = vector.broadcast %478 : f32 to vector<13x13xf32>
    %480 = arith.mulf %479, %461 : vector<13x13xf32>
    %481 = arith.addf %459, %480 : vector<13x13xf32>
    %c0_93 = arith.constant 0 : index
    %c2_94 = arith.constant 2 : index
    %c1_95 = arith.constant 1 : index
    %c0_96 = arith.constant 0 : index
    %482 = vector.load %arg3[%c0_93, %c2_94, %c1_95, %c0_96] : memref<1x3x15x15xf32, #tpu.memory_space<vmem>>, vector<1x1x13x13xf32>
    %483 = vector.shape_cast %482 : vector<1x1x13x13xf32> to vector<13x13xf32>
    %c21 = arith.constant 21 : index
    %484 = memref.load %arg1[%c21] : memref<135xf32, #tpu.memory_space<smem>>
    %485 = vector.broadcast %484 : f32 to vector<13x13xf32>
    %486 = arith.mulf %485, %483 : vector<13x13xf32>
    %487 = arith.addf %465, %486 : vector<13x13xf32>
    %c48 = arith.constant 48 : index
    %488 = memref.load %arg1[%c48] : memref<135xf32, #tpu.memory_space<smem>>
    %489 = vector.broadcast %488 : f32 to vector<13x13xf32>
    %490 = arith.mulf %489, %483 : vector<13x13xf32>
    %491 = arith.addf %469, %490 : vector<13x13xf32>
    %c75 = arith.constant 75 : index
    %492 = memref.load %arg1[%c75] : memref<135xf32, #tpu.memory_space<smem>>
    %493 = vector.broadcast %492 : f32 to vector<13x13xf32>
    %494 = arith.mulf %493, %483 : vector<13x13xf32>
    %495 = arith.addf %473, %494 : vector<13x13xf32>
    %c102 = arith.constant 102 : index
    %496 = memref.load %arg1[%c102] : memref<135xf32, #tpu.memory_space<smem>>
    %497 = vector.broadcast %496 : f32 to vector<13x13xf32>
    %498 = arith.mulf %497, %483 : vector<13x13xf32>
    %499 = arith.addf %477, %498 : vector<13x13xf32>
    %c129 = arith.constant 129 : index
    %500 = memref.load %arg1[%c129] : memref<135xf32, #tpu.memory_space<smem>>
    %501 = vector.broadcast %500 : f32 to vector<13x13xf32>
    %502 = arith.mulf %501, %483 : vector<13x13xf32>
    %503 = arith.addf %481, %502 : vector<13x13xf32>
    %c0_97 = arith.constant 0 : index
    %c2_98 = arith.constant 2 : index
    %c1_99 = arith.constant 1 : index
    %c1_100 = arith.constant 1 : index
    %504 = vector.load %arg3[%c0_97, %c2_98, %c1_99, %c1_100] : memref<1x3x15x15xf32, #tpu.memory_space<vmem>>, vector<1x1x13x13xf32>
    %505 = vector.shape_cast %504 : vector<1x1x13x13xf32> to vector<13x13xf32>
    %c22 = arith.constant 22 : index
    %506 = memref.load %arg1[%c22] : memref<135xf32, #tpu.memory_space<smem>>
    %507 = vector.broadcast %506 : f32 to vector<13x13xf32>
    %508 = arith.mulf %507, %505 : vector<13x13xf32>
    %509 = arith.addf %487, %508 : vector<13x13xf32>
    %c49 = arith.constant 49 : index
    %510 = memref.load %arg1[%c49] : memref<135xf32, #tpu.memory_space<smem>>
    %511 = vector.broadcast %510 : f32 to vector<13x13xf32>
    %512 = arith.mulf %511, %505 : vector<13x13xf32>
    %513 = arith.addf %491, %512 : vector<13x13xf32>
    %c76 = arith.constant 76 : index
    %514 = memref.load %arg1[%c76] : memref<135xf32, #tpu.memory_space<smem>>
    %515 = vector.broadcast %514 : f32 to vector<13x13xf32>
    %516 = arith.mulf %515, %505 : vector<13x13xf32>
    %517 = arith.addf %495, %516 : vector<13x13xf32>
    %c103 = arith.constant 103 : index
    %518 = memref.load %arg1[%c103] : memref<135xf32, #tpu.memory_space<smem>>
    %519 = vector.broadcast %518 : f32 to vector<13x13xf32>
    %520 = arith.mulf %519, %505 : vector<13x13xf32>
    %521 = arith.addf %499, %520 : vector<13x13xf32>
    %c130 = arith.constant 130 : index
    %522 = memref.load %arg1[%c130] : memref<135xf32, #tpu.memory_space<smem>>
    %523 = vector.broadcast %522 : f32 to vector<13x13xf32>
    %524 = arith.mulf %523, %505 : vector<13x13xf32>
    %525 = arith.addf %503, %524 : vector<13x13xf32>
    %c0_101 = arith.constant 0 : index
    %c2_102 = arith.constant 2 : index
    %c1_103 = arith.constant 1 : index
    %c2_104 = arith.constant 2 : index
    %526 = vector.load %arg3[%c0_101, %c2_102, %c1_103, %c2_104] : memref<1x3x15x15xf32, #tpu.memory_space<vmem>>, vector<1x1x13x13xf32>
    %527 = vector.shape_cast %526 : vector<1x1x13x13xf32> to vector<13x13xf32>
    %c23 = arith.constant 23 : index
    %528 = memref.load %arg1[%c23] : memref<135xf32, #tpu.memory_space<smem>>
    %529 = vector.broadcast %528 : f32 to vector<13x13xf32>
    %530 = arith.mulf %529, %527 : vector<13x13xf32>
    %531 = arith.addf %509, %530 : vector<13x13xf32>
    %c50 = arith.constant 50 : index
    %532 = memref.load %arg1[%c50] : memref<135xf32, #tpu.memory_space<smem>>
    %533 = vector.broadcast %532 : f32 to vector<13x13xf32>
    %534 = arith.mulf %533, %527 : vector<13x13xf32>
    %535 = arith.addf %513, %534 : vector<13x13xf32>
    %c77 = arith.constant 77 : index
    %536 = memref.load %arg1[%c77] : memref<135xf32, #tpu.memory_space<smem>>
    %537 = vector.broadcast %536 : f32 to vector<13x13xf32>
    %538 = arith.mulf %537, %527 : vector<13x13xf32>
    %539 = arith.addf %517, %538 : vector<13x13xf32>
    %c104 = arith.constant 104 : index
    %540 = memref.load %arg1[%c104] : memref<135xf32, #tpu.memory_space<smem>>
    %541 = vector.broadcast %540 : f32 to vector<13x13xf32>
    %542 = arith.mulf %541, %527 : vector<13x13xf32>
    %543 = arith.addf %521, %542 : vector<13x13xf32>
    %c131 = arith.constant 131 : index
    %544 = memref.load %arg1[%c131] : memref<135xf32, #tpu.memory_space<smem>>
    %545 = vector.broadcast %544 : f32 to vector<13x13xf32>
    %546 = arith.mulf %545, %527 : vector<13x13xf32>
    %547 = arith.addf %525, %546 : vector<13x13xf32>
    %c0_105 = arith.constant 0 : index
    %c2_106 = arith.constant 2 : index
    %c2_107 = arith.constant 2 : index
    %c0_108 = arith.constant 0 : index
    %548 = vector.load %arg3[%c0_105, %c2_106, %c2_107, %c0_108] : memref<1x3x15x15xf32, #tpu.memory_space<vmem>>, vector<1x1x13x13xf32>
    %549 = vector.shape_cast %548 : vector<1x1x13x13xf32> to vector<13x13xf32>
    %c24 = arith.constant 24 : index
    %550 = memref.load %arg1[%c24] : memref<135xf32, #tpu.memory_space<smem>>
    %551 = vector.broadcast %550 : f32 to vector<13x13xf32>
    %552 = arith.mulf %551, %549 : vector<13x13xf32>
    %553 = arith.addf %531, %552 : vector<13x13xf32>
    %c51 = arith.constant 51 : index
    %554 = memref.load %arg1[%c51] : memref<135xf32, #tpu.memory_space<smem>>
    %555 = vector.broadcast %554 : f32 to vector<13x13xf32>
    %556 = arith.mulf %555, %549 : vector<13x13xf32>
    %557 = arith.addf %535, %556 : vector<13x13xf32>
    %c78 = arith.constant 78 : index
    %558 = memref.load %arg1[%c78] : memref<135xf32, #tpu.memory_space<smem>>
    %559 = vector.broadcast %558 : f32 to vector<13x13xf32>
    %560 = arith.mulf %559, %549 : vector<13x13xf32>
    %561 = arith.addf %539, %560 : vector<13x13xf32>
    %c105 = arith.constant 105 : index
    %562 = memref.load %arg1[%c105] : memref<135xf32, #tpu.memory_space<smem>>
    %563 = vector.broadcast %562 : f32 to vector<13x13xf32>
    %564 = arith.mulf %563, %549 : vector<13x13xf32>
    %565 = arith.addf %543, %564 : vector<13x13xf32>
    %c132 = arith.constant 132 : index
    %566 = memref.load %arg1[%c132] : memref<135xf32, #tpu.memory_space<smem>>
    %567 = vector.broadcast %566 : f32 to vector<13x13xf32>
    %568 = arith.mulf %567, %549 : vector<13x13xf32>
    %569 = arith.addf %547, %568 : vector<13x13xf32>
    %c0_109 = arith.constant 0 : index
    %c2_110 = arith.constant 2 : index
    %c2_111 = arith.constant 2 : index
    %c1_112 = arith.constant 1 : index
    %570 = vector.load %arg3[%c0_109, %c2_110, %c2_111, %c1_112] : memref<1x3x15x15xf32, #tpu.memory_space<vmem>>, vector<1x1x13x13xf32>
    %571 = vector.shape_cast %570 : vector<1x1x13x13xf32> to vector<13x13xf32>
    %c25 = arith.constant 25 : index
    %572 = memref.load %arg1[%c25] : memref<135xf32, #tpu.memory_space<smem>>
    %573 = vector.broadcast %572 : f32 to vector<13x13xf32>
    %574 = arith.mulf %573, %571 : vector<13x13xf32>
    %575 = arith.addf %553, %574 : vector<13x13xf32>
    %c52 = arith.constant 52 : index
    %576 = memref.load %arg1[%c52] : memref<135xf32, #tpu.memory_space<smem>>
    %577 = vector.broadcast %576 : f32 to vector<13x13xf32>
    %578 = arith.mulf %577, %571 : vector<13x13xf32>
    %579 = arith.addf %557, %578 : vector<13x13xf32>
    %c79 = arith.constant 79 : index
    %580 = memref.load %arg1[%c79] : memref<135xf32, #tpu.memory_space<smem>>
    %581 = vector.broadcast %580 : f32 to vector<13x13xf32>
    %582 = arith.mulf %581, %571 : vector<13x13xf32>
    %583 = arith.addf %561, %582 : vector<13x13xf32>
    %c106 = arith.constant 106 : index
    %584 = memref.load %arg1[%c106] : memref<135xf32, #tpu.memory_space<smem>>
    %585 = vector.broadcast %584 : f32 to vector<13x13xf32>
    %586 = arith.mulf %585, %571 : vector<13x13xf32>
    %587 = arith.addf %565, %586 : vector<13x13xf32>
    %c133 = arith.constant 133 : index
    %588 = memref.load %arg1[%c133] : memref<135xf32, #tpu.memory_space<smem>>
    %589 = vector.broadcast %588 : f32 to vector<13x13xf32>
    %590 = arith.mulf %589, %571 : vector<13x13xf32>
    %591 = arith.addf %569, %590 : vector<13x13xf32>
    %c0_113 = arith.constant 0 : index
    %c2_114 = arith.constant 2 : index
    %c2_115 = arith.constant 2 : index
    %c2_116 = arith.constant 2 : index
    %592 = vector.load %arg3[%c0_113, %c2_114, %c2_115, %c2_116] : memref<1x3x15x15xf32, #tpu.memory_space<vmem>>, vector<1x1x13x13xf32>
    %593 = vector.shape_cast %592 : vector<1x1x13x13xf32> to vector<13x13xf32>
    %c26 = arith.constant 26 : index
    %594 = memref.load %arg1[%c26] : memref<135xf32, #tpu.memory_space<smem>>
    %595 = vector.broadcast %594 : f32 to vector<13x13xf32>
    %596 = arith.mulf %595, %593 : vector<13x13xf32>
    %597 = arith.addf %575, %596 : vector<13x13xf32>
    %c53 = arith.constant 53 : index
    %598 = memref.load %arg1[%c53] : memref<135xf32, #tpu.memory_space<smem>>
    %599 = vector.broadcast %598 : f32 to vector<13x13xf32>
    %600 = arith.mulf %599, %593 : vector<13x13xf32>
    %601 = arith.addf %579, %600 : vector<13x13xf32>
    %c80 = arith.constant 80 : index
    %602 = memref.load %arg1[%c80] : memref<135xf32, #tpu.memory_space<smem>>
    %603 = vector.broadcast %602 : f32 to vector<13x13xf32>
    %604 = arith.mulf %603, %593 : vector<13x13xf32>
    %605 = arith.addf %583, %604 : vector<13x13xf32>
    %c107 = arith.constant 107 : index
    %606 = memref.load %arg1[%c107] : memref<135xf32, #tpu.memory_space<smem>>
    %607 = vector.broadcast %606 : f32 to vector<13x13xf32>
    %608 = arith.mulf %607, %593 : vector<13x13xf32>
    %609 = arith.addf %587, %608 : vector<13x13xf32>
    %c134 = arith.constant 134 : index
    %610 = memref.load %arg1[%c134] : memref<135xf32, #tpu.memory_space<smem>>
    %611 = vector.broadcast %610 : f32 to vector<13x13xf32>
    %612 = arith.mulf %611, %593 : vector<13x13xf32>
    %613 = arith.addf %591, %612 : vector<13x13xf32>
    %c0_117 = arith.constant 0 : index
    %c0_118 = arith.constant 0 : index
    %c0_119 = arith.constant 0 : index
    %c0_120 = arith.constant 0 : index
    %614 = vector.load %arg4[%c0_117, %c0_118, %c0_119, %c0_120] : memref<1x5x13x13xf32, #tpu.memory_space<vmem>>, vector<1x1x13x13xf32>
    %615 = vector.shape_cast %614 : vector<1x1x13x13xf32> to vector<13x13xf32>
    %616 = arith.addf %597, %615 : vector<13x13xf32>
    %c0_121 = arith.constant 0 : index
    %c0_122 = arith.constant 0 : index
    %c0_123 = arith.constant 0 : index
    %c0_124 = arith.constant 0 : index
    %617 = vector.load %arg5[%c0_121, %c0_122, %c0_123, %c0_124] : memref<1x5x13x13xf32, #tpu.memory_space<vmem>>, vector<1x1x13x13xf32>
    %618 = vector.shape_cast %617 : vector<1x1x13x13xf32> to vector<13x13xf32>
    %619 = vector.shape_cast %616 : vector<13x13xf32> to vector<1x1x13x13xf32>
    tpu.vector_store %arg5[%c0_121, %c0_122, %c0_123, %c0_124], %619 {strides = array<i32>} : memref<1x5x13x13xf32, #tpu.memory_space<vmem>>, vector<1x1x13x13xf32>,
    %c0_125 = arith.constant 0 : index
    %c1_126 = arith.constant 1 : index
    %c0_127 = arith.constant 0 : index
    %c0_128 = arith.constant 0 : index
    %620 = vector.load %arg4[%c0_125, %c1_126, %c0_127, %c0_128] : memref<1x5x13x13xf32, #tpu.memory_space<vmem>>, vector<1x1x13x13xf32>
    %621 = vector.shape_cast %620 : vector<1x1x13x13xf32> to vector<13x13xf32>
    %622 = arith.addf %601, %621 : vector<13x13xf32>
    %c0_129 = arith.constant 0 : index
    %c1_130 = arith.constant 1 : index
    %c0_131 = arith.constant 0 : index
    %c0_132 = arith.constant 0 : index
    %623 = vector.load %arg5[%c0_129, %c1_130, %c0_131, %c0_132] : memref<1x5x13x13xf32, #tpu.memory_space<vmem>>, vector<1x1x13x13xf32>
    %624 = vector.shape_cast %623 : vector<1x1x13x13xf32> to vector<13x13xf32>
    %625 = vector.shape_cast %622 : vector<13x13xf32> to vector<1x1x13x13xf32>
    tpu.vector_store %arg5[%c0_129, %c1_130, %c0_131, %c0_132], %625 {strides = array<i32>} : memref<1x5x13x13xf32, #tpu.memory_space<vmem>>, vector<1x1x13x13xf32>,
    %c0_133 = arith.constant 0 : index
    %c2_134 = arith.constant 2 : index
    %c0_135 = arith.constant 0 : index
    %c0_136 = arith.constant 0 : index
    %626 = vector.load %arg4[%c0_133, %c2_134, %c0_135, %c0_136] : memref<1x5x13x13xf32, #tpu.memory_space<vmem>>, vector<1x1x13x13xf32>
    %627 = vector.shape_cast %626 : vector<1x1x13x13xf32> to vector<13x13xf32>
    %628 = arith.addf %605, %627 : vector<13x13xf32>
    %c0_137 = arith.constant 0 : index
    %c2_138 = arith.constant 2 : index
    %c0_139 = arith.constant 0 : index
    %c0_140 = arith.constant 0 : index
    %629 = vector.load %arg5[%c0_137, %c2_138, %c0_139, %c0_140] : memref<1x5x13x13xf32, #tpu.memory_space<vmem>>, vector<1x1x13x13xf32>
    %630 = vector.shape_cast %629 : vector<1x1x13x13xf32> to vector<13x13xf32>
    %631 = vector.shape_cast %628 : vector<13x13xf32> to vector<1x1x13x13xf32>
    tpu.vector_store %arg5[%c0_137, %c2_138, %c0_139, %c0_140], %631 {strides = array<i32>} : memref<1x5x13x13xf32, #tpu.memory_space<vmem>>, vector<1x1x13x13xf32>,
    %c0_141 = arith.constant 0 : index
    %c3_142 = arith.constant 3 : index
    %c0_143 = arith.constant 0 : index
    %c0_144 = arith.constant 0 : index
    %632 = vector.load %arg4[%c0_141, %c3_142, %c0_143, %c0_144] : memref<1x5x13x13xf32, #tpu.memory_space<vmem>>, vector<1x1x13x13xf32>
    %633 = vector.shape_cast %632 : vector<1x1x13x13xf32> to vector<13x13xf32>
    %634 = arith.addf %609, %633 : vector<13x13xf32>
    %c0_145 = arith.constant 0 : index
    %c3_146 = arith.constant 3 : index
    %c0_147 = arith.constant 0 : index
    %c0_148 = arith.constant 0 : index
    %635 = vector.load %arg5[%c0_145, %c3_146, %c0_147, %c0_148] : memref<1x5x13x13xf32, #tpu.memory_space<vmem>>, vector<1x1x13x13xf32>
    %636 = vector.shape_cast %635 : vector<1x1x13x13xf32> to vector<13x13xf32>
    %637 = vector.shape_cast %634 : vector<13x13xf32> to vector<1x1x13x13xf32>
    tpu.vector_store %arg5[%c0_145, %c3_146, %c0_147, %c0_148], %637 {strides = array<i32>} : memref<1x5x13x13xf32, #tpu.memory_space<vmem>>, vector<1x1x13x13xf32>,
    %c0_149 = arith.constant 0 : index
    %c4_150 = arith.constant 4 : index
    %c0_151 = arith.constant 0 : index
    %c0_152 = arith.constant 0 : index
    %638 = vector.load %arg4[%c0_149, %c4_150, %c0_151, %c0_152] : memref<1x5x13x13xf32, #tpu.memory_space<vmem>>, vector<1x1x13x13xf32>
    %639 = vector.shape_cast %638 : vector<1x1x13x13xf32> to vector<13x13xf32>
    %640 = arith.addf %613, %639 : vector<13x13xf32>
    %c0_153 = arith.constant 0 : index
    %c4_154 = arith.constant 4 : index
    %c0_155 = arith.constant 0 : index
    %c0_156 = arith.constant 0 : index
    %641 = vector.load %arg5[%c0_153, %c4_154, %c0_155, %c0_156] : memref<1x5x13x13xf32, #tpu.memory_space<vmem>>, vector<1x1x13x13xf32>
    %642 = vector.shape_cast %641 : vector<1x1x13x13xf32> to vector<13x13xf32>
    %643 = vector.shape_cast %640 : vector<13x13xf32> to vector<1x1x13x13xf32>
    tpu.vector_store %arg5[%c0_153, %c4_154, %c0_155, %c0_156], %643 {strides = array<i32>} : memref<1x5x13x13xf32, #tpu.memory_space<vmem>>, vector<1x1x13x13xf32>,
    return
  }
  func.func @transform_0(%arg0: i32) -> i32 {
    %c0_i32 = arith.constant 0 : i32
    %c0_i32_0 = arith.constant 0 : i32
    return %c0_i32 : i32
  }
  func.func @transform_1(%arg0: i32) -> i32 {
    %c0_i32 = arith.constant 0 : i32
    %c0_i32_0 = arith.constant 0 : i32
    return %c0_i32 : i32
  }
  func.func @transform_2(%arg0: i32) -> (i32, i32, i32, i32) {
    %c0_i32 = arith.constant 0 : i32
    %c0_i32_0 = arith.constant 0 : i32
    %c0_i32_1 = arith.constant 0 : i32
    %c0_i32_2 = arith.constant 0 : i32
    return %arg0, %c0_i32, %c0_i32_0, %c0_i32_1 : i32, i32, i32, i32
  }
  func.func @transform_3(%arg0: i32) -> (i32, i32, i32, i32) {
    %c0_i32 = arith.constant 0 : i32
    %c0_i32_0 = arith.constant 0 : i32
    %c0_i32_1 = arith.constant 0 : i32
    %c0_i32_2 = arith.constant 0 : i32
    return %arg0, %c0_i32, %c0_i32_0, %c0_i32_1 : i32, i32, i32, i32
  }
  func.func @transform_4(%arg0: i32) -> (i32, i32, i32, i32) {
    %c0_i32 = arith.constant 0 : i32
    %c0_i32_0 = arith.constant 0 : i32
    %c0_i32_1 = arith.constant 0 : i32
    %c0_i32_2 = arith.constant 0 : i32
    return %arg0, %c0_i32, %c0_i32_0, %c0_i32_1 : i32, i32, i32, i32
  }
}

</mosaic_0001>

<llo_original>
// kernel: tpu_custom_call.1
$region0: #{tpu_custom_call.1}
  #allocation0 [shape = 'u32[]', space=smem, size = 0x4, offset = 0x4, fixed_abs, tag = 'smem constant byte address 0x4 - core index']
  #allocation1 [shape = 'u32[72,128]{1,0:T(1,128)}', space=vmem, size = 0x9000, scoped, tag = 'internal scratch']
  %s0 = inlined_call_operand.vmem [shape: f32[135], index: 0, kind: input, shape index: {}]
  %s1 = inlined_call_operand.vmem [shape: f32[5], index: 1, kind: input, shape index: {}]
  %s2 = inlined_call_operand.vmem [shape: f32[1,3,15,15], index: 2, kind: input, shape index: {}]
  %s3 = inlined_call_operand.vmem [shape: f32[1,5,13,13], index: 3, kind: input, shape index: {}]
  %s4 = inlined_call_operand.vmem [shape: f32[1,5,13,13], index: 4, kind: output, shape index: {}]
  %s5 = sld [smem:[#allocation0]]
  $region34: #{tpu_custom_call.1} parent=0
    _
  %s7 = ssub.s32 1, %s5
  %s8 = scalar_select 0, %s7, %s5
  $region1: #{tpu_custom_call.1} parent=0
    #allocation2 [shape = 'u8[1024]{0}', space=smem, size = 0x400, scoped, tag = 'input window, operand 0, single buffered']
    #allocation3 [shape = 's32[1]{0}', space=sflag, size = 0x4, scoped, tag = 'scoped memory for tpu_custom_call.1']
    #allocation4 [shape = 'u8[512]{0}', space=smem, size = 0x200, scoped, tag = 'input window, operand 1, single buffered']
    #allocation5 [shape = 's32[1]{0}', space=sflag, size = 0x4, scoped, tag = 'scoped memory for tpu_custom_call.1']
    %9 = vsyncpa [#allocation3], 0
    %10 = vsyncpa [#allocation5], 0
    // Predicated region
    $region2: #{tpu_custom_call.1} parent=1 // pred_check
      _
    $region3: #{tpu_custom_call.1} parent=1 // pred_check_branch
      %12 = sbr.rel (0) target = $region5
    $region4: #{tpu_custom_call.1} parent=1 // pred_region
      %14 = vsyncadd [#allocation3], 0
      %s16 = sshll.u32 %s0, 4
      %s17 = int_to_ptr.vmem [resolvable:$true] %s16
      %19 = dma.vmem_to_smem %s17, 32, [#allocation2], [#allocation3]
    $region5: #{tpu_custom_call.1} parent=1 // pred_fallthru
      _
    // Predicated region
    $region6: #{tpu_custom_call.1} parent=1 // pred_check
      _
    $region7: #{tpu_custom_call.1} parent=1 // pred_check_branch
      %21 = sbr.rel (0) target = $region9
    $region8: #{tpu_custom_call.1} parent=1 // pred_region
      %23 = vsyncadd [#allocation5], 0
      %s25 = sshll.u32 %s1, 4
      %s26 = int_to_ptr.vmem [resolvable:$true] %s25
      %28 = dma.vmem_to_smem %s26, 16, [#allocation4], [#allocation5]
    $region9: #{tpu_custom_call.1} parent=1 // pred_fallthru
      _
    // Predicated region
    $region10: #{tpu_custom_call.1} parent=1 // pred_check
      _
    $region11: #{tpu_custom_call.1} parent=1 // pred_check_branch
      %30 = sbr.rel (0) target = $region13
    $region12: #{tpu_custom_call.1} parent=1 // pred_region
      _
    $region13: #{tpu_custom_call.1} parent=1 // pred_fallthru
      _
    // Predicated region
    $region14: #{tpu_custom_call.1} parent=1 // pred_check
      _
    $region15: #{tpu_custom_call.1} parent=1 // pred_check_branch
      %32 = sbr.rel (0) target = $region17
    $region16: #{tpu_custom_call.1} parent=1 // pred_region
      _
    $region17: #{tpu_custom_call.1} parent=1 // pred_fallthru
      _
    // Predicated region
    $region18: #{tpu_custom_call.1} parent=1 // pred_check
      _
    $region19: #{tpu_custom_call.1} parent=1 // pred_check_branch
      %34 = sbr.rel (0) target = $region21
    $region20: #{tpu_custom_call.1} parent=1 // pred_region
      %36 = dma.done [#allocation3], 32
    $region21: #{tpu_custom_call.1} parent=1 // pred_fallthru
      _
    // Predicated region
    $region22: #{tpu_custom_call.1} parent=1 // pred_check
      _
    $region23: #{tpu_custom_call.1} parent=1 // pred_check_branch
      %38 = sbr.rel (0) target = $region25
    $region24: #{tpu_custom_call.1} parent=1 // pred_region
      %40 = dma.done [#allocation5], 16
    $region25: #{tpu_custom_call.1} parent=1 // pred_fallthru
      _
    %41 = sfence
    %s42 = sld [smem:[#allocation4]]
    %v43 = vstv %s42
    %v44 = vadd.f32 %v43, 0.0
    %s45 = sld [smem:[#allocation4 + $0x1]]
    %v46 = vstv %s45
    %v47 = vadd.f32 %v46, 0.0
    %s48 = sld [smem:[#allocation4 + $0x2]]
    %v49 = vstv %s48
    %v50 = vadd.f32 %v49, 0.0
    %s51 = sld [smem:[#allocation4 + $0x3]]
    %v52 = vstv %s51
    %v53 = vadd.f32 %v52, 0.0
    %s54 = sld [smem:[#allocation4 + $0x4]]
    %v55 = vstv %s54
    %v56 = vadd.f32 %v55, 0.0
    %v57 = vld [vmem:[%s2] sm:$0xff]
    %v58 = vld [vmem:[%s2 + $0x8] sm:$0x1f]
    %s59 = sld [smem:[#allocation2]]
    %v60 = vstv %s59
    %v61 = vmul.f32 %v60, %v57
    %v62 = vmul.f32 %v60, %v58
    %v63 = vadd.f32 %v44, %v61
    %v64 = vadd.f32 %v44, %v62
    %s65 = sld [smem:[#allocation2 + $0x1b]]
    %v66 = vstv %s65
    %v67 = vmul.f32 %v66, %v57
    %v68 = vmul.f32 %v66, %v58
    %v69 = vadd.f32 %v47, %v67
    %v70 = vadd.f32 %v47, %v68
    %s71 = sld [smem:[#allocation2 + $0x36]]
    %v72 = vstv %s71
    %v73 = vmul.f32 %v72, %v57
    %v74 = vmul.f32 %v72, %v58
    %v75 = vadd.f32 %v50, %v73
    %v76 = vadd.f32 %v50, %v74
    %s77 = sld [smem:[#allocation2 + $0x51]]
    %v78 = vstv %s77
    %v79 = vmul.f32 %v78, %v57
    %v80 = vmul.f32 %v78, %v58
    %v81 = vadd.f32 %v53, %v79
    %v82 = vadd.f32 %v53, %v80
    %s83 = sld [smem:[#allocation2 + $0x6c]]
    %v84 = vstv %s83
    %v85 = vmul.f32 %v84, %v57
    %v86 = vmul.f32 %v84, %v58
    %v87 = vadd.f32 %v56, %v85
    %v88 = vadd.f32 %v56, %v86
    %s89 = sld [smem:[#allocation2 + $0x1]]
    %v90 = vstv %s89
    %v91 = vmul.f32 %v90, %v57
    %v92 = vmul.f32 %v90, %v58
    %95 = vrot.lane.b32.xlu0 %v91, 127
    %v96 = vpop.permute.xlu0 %95
    %97 = vrot.lane.b32.xlu0 %v92, 127
    %v98 = vpop.permute.xlu0 %97
    %v101 = vadd.f32 %v63, %v96
    %v102 = vadd.f32 %v64, %v98
    %s103 = sld [smem:[#allocation2 + $0x1c]]
    %v104 = vstv %s103
    %v105 = vmul.f32 %v104, %v57
    %v106 = vmul.f32 %v104, %v58
    %109 = vrot.lane.b32.xlu0 %v105, 127
    %v110 = vpop.permute.xlu0 %109
    %111 = vrot.lane.b32.xlu0 %v106, 127
    %v112 = vpop.permute.xlu0 %111
    %v115 = vadd.f32 %v69, %v110
    %v116 = vadd.f32 %v70, %v112
    %s117 = sld [smem:[#allocation2 + $0x37]]
    %v118 = vstv %s117
    %v119 = vmul.f32 %v118, %v57
    %v120 = vmul.f32 %v118, %v58
    %123 = vrot.lane.b32.xlu0 %v119, 127
    %v124 = vpop.permute.xlu0 %123
    %125 = vrot.lane.b32.xlu0 %v120, 127
    %v126 = vpop.permute.xlu0 %125
    %v129 = vadd.f32 %v75, %v124
    %v130 = vadd.f32 %v76, %v126
    %s131 = sld [smem:[#allocation2 + $0x52]]
    %v132 = vstv %s131
    %v133 = vmul.f32 %v132, %v57
    %v134 = vmul.f32 %v132, %v58
    %137 = vrot.lane.b32.xlu0 %v133, 127
    %v138 = vpop.permute.xlu0 %137
    %139 = vrot.lane.b32.xlu0 %v134, 127
    %v140 = vpop.permute.xlu0 %139
    %v143 = vadd.f32 %v81, %v138
    %v144 = vadd.f32 %v82, %v140
    %s145 = sld [smem:[#allocation2 + $0x6d]]
    %v146 = vstv %s145
    %v147 = vmul.f32 %v146, %v57
    %v148 = vmul.f32 %v146, %v58
    %151 = vrot.lane.b32.xlu0 %v147, 127
    %v152 = vpop.permute.xlu0 %151
    %153 = vrot.lane.b32.xlu0 %v148, 127
    %v154 = vpop.permute.xlu0 %153
    %v157 = vadd.f32 %v87, %v152
    %v158 = vadd.f32 %v88, %v154
    %s159 = sld [smem:[#allocation2 + $0x2]]
    %v160 = vstv %s159
    %v161 = vmul.f32 %v160, %v57
    %v162 = vmul.f32 %v160, %v58
    %165 = vrot.lane.b32.xlu0 %v161, 126
    %v166 = vpop.permute.xlu0 %165
    %167 = vrot.lane.b32.xlu0 %v162, 126
    %v168 = vpop.permute.xlu0 %167
    %v171 = vadd.f32 %v101, %v166
    %v172 = vadd.f32 %v102, %v168
    %s173 = sld [smem:[#allocation2 + $0x1d]]
    %v174 = vstv %s173
    %v175 = vmul.f32 %v174, %v57
    %v176 = vmul.f32 %v174, %v58
    %179 = vrot.lane.b32.xlu0 %v175, 126
    %v180 = vpop.permute.xlu0 %179
    %181 = vrot.lane.b32.xlu0 %v176, 126
    %v182 = vpop.permute.xlu0 %181
    %v185 = vadd.f32 %v115, %v180
    %v186 = vadd.f32 %v116, %v182
    %s187 = sld [smem:[#allocation2 + $0x38]]
    %v188 = vstv %s187
    %v189 = vmul.f32 %v188, %v57
    %v190 = vmul.f32 %v188, %v58
    %193 = vrot.lane.b32.xlu0 %v189, 126
    %v194 = vpop.permute.xlu0 %193
    %195 = vrot.lane.b32.xlu0 %v190, 126
    %v196 = vpop.permute.xlu0 %195
    %v199 = vadd.f32 %v129, %v194
    %v200 = vadd.f32 %v130, %v196
    %s201 = sld [smem:[#allocation2 + $0x53]]
    %v202 = vstv %s201
    %v203 = vmul.f32 %v202, %v57
    %v204 = vmul.f32 %v202, %v58
    %207 = vrot.lane.b32.xlu0 %v203, 126
    %v208 = vpop.permute.xlu0 %207
    %209 = vrot.lane.b32.xlu0 %v204, 126
    %v210 = vpop.permute.xlu0 %209
    %v213 = vadd.f32 %v143, %v208
    %v214 = vadd.f32 %v144, %v210
    %s215 = sld [smem:[#allocation2 + $0x6e]]
    %v216 = vstv %s215
    %v217 = vmul.f32 %v216, %v57
    %v218 = vmul.f32 %v216, %v58
    %221 = vrot.lane.b32.xlu0 %v217, 126
    %v222 = vpop.permute.xlu0 %221
    %223 = vrot.lane.b32.xlu0 %v218, 126
    %v224 = vpop.permute.xlu0 %223
    %v227 = vadd.f32 %v157, %v222
    %v228 = vadd.f32 %v158, %v224
    %v229 = vld [vmem:[%s2 + $0x1] sm:$0xff]
    %v230 = vld [vmem:[%s2 + $0x9] sm:$0x1f]
    %s231 = sld [smem:[#allocation2 + $0x3]]
    %v232 = vstv %s231
    %v233 = vmul.f32 %v232, %v229
    %v234 = vmul.f32 %v232, %v230
    %v235 = vadd.f32 %v171, %v233
    %v236 = vadd.f32 %v172, %v234
    %s237 = sld [smem:[#allocation2 + $0x1e]]
    %v238 = vstv %s237
    %v239 = vmul.f32 %v238, %v229
    %v240 = vmul.f32 %v238, %v230
    %v241 = vadd.f32 %v185, %v239
    %v242 = vadd.f32 %v186, %v240
    %s243 = sld [smem:[#allocation2 + $0x39]]
    %v244 = vstv %s243
    %v245 = vmul.f32 %v244, %v229
    %v246 = vmul.f32 %v244, %v230
    %v247 = vadd.f32 %v199, %v245
    %v248 = vadd.f32 %v200, %v246
    %s249 = sld [smem:[#allocation2 + $0x54]]
    %v250 = vstv %s249
    %v251 = vmul.f32 %v250, %v229
    %v252 = vmul.f32 %v250, %v230
    %v253 = vadd.f32 %v213, %v251
    %v254 = vadd.f32 %v214, %v252
    %s255 = sld [smem:[#allocation2 + $0x6f]]
    %v256 = vstv %s255
    %v257 = vmul.f32 %v256, %v229
    %v258 = vmul.f32 %v256, %v230
    %v259 = vadd.f32 %v227, %v257
    %v260 = vadd.f32 %v228, %v258
    %s261 = sld [smem:[#allocation2 + $0x4]]
    %v262 = vstv %s261
    %v263 = vmul.f32 %v262, %v229
    %v264 = vmul.f32 %v262, %v230
    %267 = vrot.lane.b32.xlu0 %v263, 127
    %v268 = vpop.permute.xlu0 %267
    %269 = vrot.lane.b32.xlu0 %v264, 127
    %v270 = vpop.permute.xlu0 %269
    %v273 = vadd.f32 %v235, %v268
    %v274 = vadd.f32 %v236, %v270
    %s275 = sld [smem:[#allocation2 + $0x1f]]
    %v276 = vstv %s275
    %v277 = vmul.f32 %v276, %v229
    %v278 = vmul.f32 %v276, %v230
    %281 = vrot.lane.b32.xlu0 %v277, 127
    %v282 = vpop.permute.xlu0 %281
    %283 = vrot.lane.b32.xlu0 %v278, 127
    %v284 = vpop.permute.xlu0 %283
    %v287 = vadd.f32 %v241, %v282
    %v288 = vadd.f32 %v242, %v284
    %s289 = sld [smem:[#allocation2 + $0x3a]]
    %v290 = vstv %s289
    %v291 = vmul.f32 %v290, %v229
    %v292 = vmul.f32 %v290, %v230
    %295 = vrot.lane.b32.xlu0 %v291, 127
    %v296 = vpop.permute.xlu0 %295
    %297 = vrot.lane.b32.xlu0 %v292, 127
    %v298 = vpop.permute.xlu0 %297
    %v301 = vadd.f32 %v247, %v296
    %v302 = vadd.f32 %v248, %v298
    %s303 = sld [smem:[#allocation2 + $0x55]]
    %v304 = vstv %s303
    %v305 = vmul.f32 %v304, %v229
    %v306 = vmul.f32 %v304, %v230
    %309 = vrot.lane.b32.xlu0 %v305, 127
    %v310 = vpop.permute.xlu0 %309
    %311 = vrot.lane.b32.xlu0 %v306, 127
    %v312 = vpop.permute.xlu0 %311
    %v315 = vadd.f32 %v253, %v310
    %v316 = vadd.f32 %v254, %v312
    %s317 = sld [smem:[#allocation2 + $0x70]]
    %v318 = vstv %s317
    %v319 = vmul.f32 %v318, %v229
    %v320 = vmul.f32 %v318, %v230
    %323 = vrot.lane.b32.xlu0 %v319, 127
    %v324 = vpop.permute.xlu0 %323
    %325 = vrot.lane.b32.xlu0 %v320, 127
    %v326 = vpop.permute.xlu0 %325
    %v329 = vadd.f32 %v259, %v324
    %v330 = vadd.f32 %v260, %v326
    %s331 = sld [smem:[#allocation2 + $0x5]]
    %v332 = vstv %s331
    %v333 = vmul.f32 %v332, %v229
    %v334 = vmul.f32 %v332, %v230
    %337 = vrot.lane.b32.xlu0 %v333, 126
    %v338 = vpop.permute.xlu0 %337
    %339 = vrot.lane.b32.xlu0 %v334, 126
    %v340 = vpop.permute.xlu0 %339
    %v343 = vadd.f32 %v273, %v338
    %v344 = vadd.f32 %v274, %v340
    %s345 = sld [smem:[#allocation2 + $0x20]]
    %v346 = vstv %s345
    %v347 = vmul.f32 %v346, %v229
    %v348 = vmul.f32 %v346, %v230
    %351 = vrot.lane.b32.xlu0 %v347, 126
    %v352 = vpop.permute.xlu0 %351
    %353 = vrot.lane.b32.xlu0 %v348, 126
    %v354 = vpop.permute.xlu0 %353
    %v357 = vadd.f32 %v287, %v352
    %v358 = vadd.f32 %v288, %v354
    %s359 = sld [smem:[#allocation2 + $0x3b]]
    %v360 = vstv %s359
    %v361 = vmul.f32 %v360, %v229
    %v362 = vmul.f32 %v360, %v230
    %365 = vrot.lane.b32.xlu0 %v361, 126
    %v366 = vpop.permute.xlu0 %365
    %367 = vrot.lane.b32.xlu0 %v362, 126
    %v368 = vpop.permute.xlu0 %367
    %v371 = vadd.f32 %v301, %v366
    %v372 = vadd.f32 %v302, %v368
    %s373 = sld [smem:[#allocation2 + $0x56]]
    %v374 = vstv %s373
    %v375 = vmul.f32 %v374, %v229
    %v376 = vmul.f32 %v374, %v230
    %379 = vrot.lane.b32.xlu0 %v375, 126
    %v380 = vpop.permute.xlu0 %379
    %381 = vrot.lane.b32.xlu0 %v376, 126
    %v382 = vpop.permute.xlu0 %381
    %v385 = vadd.f32 %v315, %v380
    %v386 = vadd.f32 %v316, %v382
    %s387 = sld [smem:[#allocation2 + $0x71]]
    %v388 = vstv %s387
    %v389 = vmul.f32 %v388, %v229
    %v390 = vmul.f32 %v388, %v230
    %393 = vrot.lane.b32.xlu0 %v389, 126
    %v394 = vpop.permute.xlu0 %393
    %395 = vrot.lane.b32.xlu0 %v390, 126
    %v396 = vpop.permute.xlu0 %395
    %v399 = vadd.f32 %v329, %v394
    %v400 = vadd.f32 %v330, %v396
    %v401 = vld [vmem:[%s2 + $0x2] sm:$0xff]
    %v402 = vld [vmem:[%s2 + $0xa] sm:$0x1f]
    %s403 = sld [smem:[#allocation2 + $0x6]]
    %v404 = vstv %s403
    %v405 = vmul.f32 %v404, %v401
    %v406 = vmul.f32 %v404, %v402
    %v407 = vadd.f32 %v343, %v405
    %v408 = vadd.f32 %v344, %v406
    %s409 = sld [smem:[#allocation2 + $0x21]]
    %v410 = vstv %s409
    %v411 = vmul.f32 %v410, %v401
    %v412 = vmul.f32 %v410, %v402
    %v413 = vadd.f32 %v357, %v411
    %v414 = vadd.f32 %v358, %v412
    %s415 = sld [smem:[#allocation2 + $0x3c]]
    %v416 = vstv %s415
    %v417 = vmul.f32 %v416, %v401
    %v418 = vmul.f32 %v416, %v402
    %v419 = vadd.f32 %v371, %v417
    %v420 = vadd.f32 %v372, %v418
    %s421 = sld [smem:[#allocation2 + $0x57]]
    %v422 = vstv %s421
    %v423 = vmul.f32 %v422, %v401
    %v424 = vmul.f32 %v422, %v402
    %v425 = vadd.f32 %v385, %v423
    %v426 = vadd.f32 %v386, %v424
    %s427 = sld [smem:[#allocation2 + $0x72]]
    %v428 = vstv %s427
    %v429 = vmul.f32 %v428, %v401
    %v430 = vmul.f32 %v428, %v402
    %v431 = vadd.f32 %v399, %v429
    %v432 = vadd.f32 %v400, %v430
    %s433 = sld [smem:[#allocation2 + $0x7]]
    %v434 = vstv %s433
    %v435 = vmul.f32 %v434, %v401
    %v436 = vmul.f32 %v434, %v402
    %439 = vrot.lane.b32.xlu0 %v435, 127
    %v440 = vpop.permute.xlu0 %439
    %441 = vrot.lane.b32.xlu0 %v436, 127
    %v442 = vpop.permute.xlu0 %441
    %v445 = vadd.f32 %v407, %v440
    %v446 = vadd.f32 %v408, %v442
    %s447 = sld [smem:[#allocation2 + $0x22]]
    %v448 = vstv %s447
    %v449 = vmul.f32 %v448, %v401
    %v450 = vmul.f32 %v448, %v402
    %453 = vrot.lane.b32.xlu0 %v449, 127
    %v454 = vpop.permute.xlu0 %453
    %455 = vrot.lane.b32.xlu0 %v450, 127
    %v456 = vpop.permute.xlu0 %455
    %v459 = vadd.f32 %v413, %v454
    %v460 = vadd.f32 %v414, %v456
    %s461 = sld [smem:[#allocation2 + $0x3d]]
    %v462 = vstv %s461
    %v463 = vmul.f32 %v462, %v401
    %v464 = vmul.f32 %v462, %v402
    %467 = vrot.lane.b32.xlu0 %v463, 127
    %v468 = vpop.permute.xlu0 %467
    %469 = vrot.lane.b32.xlu0 %v464, 127
    %v470 = vpop.permute.xlu0 %469
    %v473 = vadd.f32 %v419, %v468
    %v474 = vadd.f32 %v420, %v470
    %s475 = sld [smem:[#allocation2 + $0x58]]
    %v476 = vstv %s475
    %v477 = vmul.f32 %v476, %v401
    %v478 = vmul.f32 %v476, %v402
    %481 = vrot.lane.b32.xlu0 %v477, 127
    %v482 = vpop.permute.xlu0 %481
    %483 = vrot.lane.b32.xlu0 %v478, 127
    %v484 = vpop.permute.xlu0 %483
    %v487 = vadd.f32 %v425, %v482
    %v488 = vadd.f32 %v426, %v484
    %s489 = sld [smem:[#allocation2 + $0x73]]
    %v490 = vstv %s489
    %v491 = vmul.f32 %v490, %v401
    %v492 = vmul.f32 %v490, %v402
    %495 = vrot.lane.b32.xlu0 %v491, 127
    %v496 = vpop.permute.xlu0 %495
    %497 = vrot.lane.b32.xlu0 %v492, 127
    %v498 = vpop.permute.xlu0 %497
    %v501 = vadd.f32 %v431, %v496
    %v502 = vadd.f32 %v432, %v498
    %s503 = sld [smem:[#allocation2 + $0x8]]
    %v504 = vstv %s503
    %v505 = vmul.f32 %v504, %v401
    %v506 = vmul.f32 %v504, %v402
    %509 = vrot.lane.b32.xlu0 %v505, 126
    %v510 = vpop.permute.xlu0 %509
    %511 = vrot.lane.b32.xlu0 %v506, 126
    %v512 = vpop.permute.xlu0 %511
    %v515 = vadd.f32 %v445, %v510
    %v516 = vadd.f32 %v446, %v512
    %s517 = sld [smem:[#allocation2 + $0x23]]
    %v518 = vstv %s517
    %v519 = vmul.f32 %v518, %v401
    %v520 = vmul.f32 %v518, %v402
    %523 = vrot.lane.b32.xlu0 %v519, 126
    %v524 = vpop.permute.xlu0 %523
    %525 = vrot.lane.b32.xlu0 %v520, 126
    %v526 = vpop.permute.xlu0 %525
    %v529 = vadd.f32 %v459, %v524
    %v530 = vadd.f32 %v460, %v526
    %s531 = sld [smem:[#allocation2 + $0x3e]]
    %v532 = vstv %s531
    %v533 = vmul.f32 %v532, %v401
    %v534 = vmul.f32 %v532, %v402
    %537 = vrot.lane.b32.xlu0 %v533, 126
    %v538 = vpop.permute.xlu0 %537
    %539 = vrot.lane.b32.xlu0 %v534, 126
    %v540 = vpop.permute.xlu0 %539
    %v543 = vadd.f32 %v473, %v538
    %v544 = vadd.f32 %v474, %v540
    %s545 = sld [smem:[#allocation2 + $0x59]]
    %v546 = vstv %s545
    %v547 = vmul.f32 %v546, %v401
    %v548 = vmul.f32 %v546, %v402
    %551 = vrot.lane.b32.xlu0 %v547, 126
    %v552 = vpop.permute.xlu0 %551
    %553 = vrot.lane.b32.xlu0 %v548, 126
    %v554 = vpop.permute.xlu0 %553
    %v557 = vadd.f32 %v487, %v552
    %v558 = vadd.f32 %v488, %v554
    %s559 = sld [smem:[#allocation2 + $0x74]]
    %v560 = vstv %s559
    %v561 = vmul.f32 %v560, %v401
    %v562 = vmul.f32 %v560, %v402
    %565 = vrot.lane.b32.xlu0 %v561, 126
    %v566 = vpop.permute.xlu0 %565
    %567 = vrot.lane.b32.xlu0 %v562, 126
    %v568 = vpop.permute.xlu0 %567
    %v571 = vadd.f32 %v501, %v566
    %v572 = vadd.f32 %v502, %v568
    %s573 = scalar_lea.vmem %s2, 16
    %v574 = vld [vmem:[%s573] sm:$0xff]
    %v575 = vld [vmem:[%s573 + $0x8] sm:$0x1f]
    %s576 = sld [smem:[#allocation2 + $0x9]]
    %v577 = vstv %s576
    %v578 = vmul.f32 %v577, %v574
    %v579 = vmul.f32 %v577, %v575
    %v580 = vadd.f32 %v515, %v578
    %v581 = vadd.f32 %v516, %v579
    %s582 = sld [smem:[#allocation2 + $0x24]]
    %v583 = vstv %s582
    %v584 = vmul.f32 %v583, %v574
    %v585 = vmul.f32 %v583, %v575
    %v586 = vadd.f32 %v529, %v584
    %v587 = vadd.f32 %v530, %v585
    %s588 = sld [smem:[#allocation2 + $0x3f]]
    %v589 = vstv %s588
    %v590 = vmul.f32 %v589, %v574
    %v591 = vmul.f32 %v589, %v575
    %v592 = vadd.f32 %v543, %v590
    %v593 = vadd.f32 %v544, %v591
    %s594 = sld [smem:[#allocation2 + $0x5a]]
    %v595 = vstv %s594
    %v596 = vmul.f32 %v595, %v574
    %v597 = vmul.f32 %v595, %v575
    %v598 = vadd.f32 %v557, %v596
    %v599 = vadd.f32 %v558, %v597
    %s600 = sld [smem:[#allocation2 + $0x75]]
    %v601 = vstv %s600
    %v602 = vmul.f32 %v601, %v574
    %v603 = vmul.f32 %v601, %v575
    %v604 = vadd.f32 %v571, %v602
    %v605 = vadd.f32 %v572, %v603
    %s606 = sld [smem:[#allocation2 + $0xa]]
    %v607 = vstv %s606
    %v608 = vmul.f32 %v607, %v574
    %v609 = vmul.f32 %v607, %v575
    %612 = vrot.lane.b32.xlu0 %v608, 127
    %v613 = vpop.permute.xlu0 %612
    %614 = vrot.lane.b32.xlu0 %v609, 127
    %v615 = vpop.permute.xlu0 %614
    %v618 = vadd.f32 %v580, %v613
    %v619 = vadd.f32 %v581, %v615
    %s620 = sld [smem:[#allocation2 + $0x25]]
    %v621 = vstv %s620
    %v622 = vmul.f32 %v621, %v574
    %v623 = vmul.f32 %v621, %v575
    %626 = vrot.lane.b32.xlu0 %v622, 127
    %v627 = vpop.permute.xlu0 %626
    %628 = vrot.lane.b32.xlu0 %v623, 127
    %v629 = vpop.permute.xlu0 %628
    %v632 = vadd.f32 %v586, %v627
    %v633 = vadd.f32 %v587, %v629
    %s634 = sld [smem:[#allocation2 + $0x40]]
    %v635 = vstv %s634
    %v636 = vmul.f32 %v635, %v574
    %v637 = vmul.f32 %v635, %v575
    %640 = vrot.lane.b32.xlu0 %v636, 127
    %v641 = vpop.permute.xlu0 %640
    %642 = vrot.lane.b32.xlu0 %v637, 127
    %v643 = vpop.permute.xlu0 %642
    %v646 = vadd.f32 %v592, %v641
    %v647 = vadd.f32 %v593, %v643
    %s648 = sld [smem:[#allocation2 + $0x5b]]
    %v649 = vstv %s648
    %v650 = vmul.f32 %v649, %v574
    %v651 = vmul.f32 %v649, %v575
    %654 = vrot.lane.b32.xlu0 %v650, 127
    %v655 = vpop.permute.xlu0 %654
    %656 = vrot.lane.b32.xlu0 %v651, 127
    %v657 = vpop.permute.xlu0 %656
    %v660 = vadd.f32 %v598, %v655
    %v661 = vadd.f32 %v599, %v657
    %s662 = sld [smem:[#allocation2 + $0x76]]
    %v663 = vstv %s662
    %v664 = vmul.f32 %v663, %v574
    %v665 = vmul.f32 %v663, %v575
    %668 = vrot.lane.b32.xlu0 %v664, 127
    %v669 = vpop.permute.xlu0 %668
    %670 = vrot.lane.b32.xlu0 %v665, 127
    %v671 = vpop.permute.xlu0 %670
    %v674 = vadd.f32 %v604, %v669
    %v675 = vadd.f32 %v605, %v671
    %s676 = sld [smem:[#allocation2 + $0xb]]
    %v677 = vstv %s676
    %v678 = vmul.f32 %v677, %v574
    %v679 = vmul.f32 %v677, %v575
    %682 = vrot.lane.b32.xlu0 %v678, 126
    %v683 = vpop.permute.xlu0 %682
    %684 = vrot.lane.b32.xlu0 %v679, 126
    %v685 = vpop.permute.xlu0 %684
    %v688 = vadd.f32 %v618, %v683
    %v689 = vadd.f32 %v619, %v685
    %s690 = sld [smem:[#allocation2 + $0x26]]
    %v691 = vstv %s690
    %v692 = vmul.f32 %v691, %v574
    %v693 = vmul.f32 %v691, %v575
    %696 = vrot.lane.b32.xlu0 %v692, 126
    %v697 = vpop.permute.xlu0 %696
    %698 = vrot.lane.b32.xlu0 %v693, 126
    %v699 = vpop.permute.xlu0 %698
    %v702 = vadd.f32 %v632, %v697
    %v703 = vadd.f32 %v633, %v699
    %s704 = sld [smem:[#allocation2 + $0x41]]
    %v705 = vstv %s704
    %v706 = vmul.f32 %v705, %v574
    %v707 = vmul.f32 %v705, %v575
    %710 = vrot.lane.b32.xlu0 %v706, 126
    %v711 = vpop.permute.xlu0 %710
    %712 = vrot.lane.b32.xlu0 %v707, 126
    %v713 = vpop.permute.xlu0 %712
    %v716 = vadd.f32 %v646, %v711
    %v717 = vadd.f32 %v647, %v713
    %s718 = sld [smem:[#allocation2 + $0x5c]]
    %v719 = vstv %s718
    %v720 = vmul.f32 %v719, %v574
    %v721 = vmul.f32 %v719, %v575
    %724 = vrot.lane.b32.xlu0 %v720, 126
    %v725 = vpop.permute.xlu0 %724
    %726 = vrot.lane.b32.xlu0 %v721, 126
    %v727 = vpop.permute.xlu0 %726
    %v730 = vadd.f32 %v660, %v725
    %v731 = vadd.f32 %v661, %v727
    %s732 = sld [smem:[#allocation2 + $0x77]]
    %v733 = vstv %s732
    %v734 = vmul.f32 %v733, %v574
    %v735 = vmul.f32 %v733, %v575
    %738 = vrot.lane.b32.xlu0 %v734, 126
    %v739 = vpop.permute.xlu0 %738
    %740 = vrot.lane.b32.xlu0 %v735, 126
    %v741 = vpop.permute.xlu0 %740
    %v744 = vadd.f32 %v674, %v739
    %v745 = vadd.f32 %v675, %v741
    %v746 = vld [vmem:[%s573 + $0x1] sm:$0xff]
    %v747 = vld [vmem:[%s573 + $0x9] sm:$0x1f]
    %s748 = sld [smem:[#allocation2 + $0xc]]
    %v749 = vstv %s748
    %v750 = vmul.f32 %v749, %v746
    %v751 = vmul.f32 %v749, %v747
    %v752 = vadd.f32 %v688, %v750
    %v753 = vadd.f32 %v689, %v751
    %s754 = sld [smem:[#allocation2 + $0x27]]
    %v755 = vstv %s754
    %v756 = vmul.f32 %v755, %v746
    %v757 = vmul.f32 %v755, %v747
    %v758 = vadd.f32 %v702, %v756
    %v759 = vadd.f32 %v703, %v757
    %s760 = sld [smem:[#allocation2 + $0x42]]
    %v761 = vstv %s760
    %v762 = vmul.f32 %v761, %v746
    %v763 = vmul.f32 %v761, %v747
    %v764 = vadd.f32 %v716, %v762
    %v765 = vadd.f32 %v717, %v763
    %s766 = sld [smem:[#allocation2 + $0x5d]]
    %v767 = vstv %s766
    %v768 = vmul.f32 %v767, %v746
    %v769 = vmul.f32 %v767, %v747
    %v770 = vadd.f32 %v730, %v768
    %v771 = vadd.f32 %v731, %v769
    %s772 = sld [smem:[#allocation2 + $0x78]]
    %v773 = vstv %s772
    %v774 = vmul.f32 %v773, %v746
    %v775 = vmul.f32 %v773, %v747
    %v776 = vadd.f32 %v744, %v774
    %v777 = vadd.f32 %v745, %v775
    %s778 = sld [smem:[#allocation2 + $0xd]]
    %v779 = vstv %s778
    %v780 = vmul.f32 %v779, %v746
    %v781 = vmul.f32 %v779, %v747
    %784 = vrot.lane.b32.xlu0 %v780, 127
    %v785 = vpop.permute.xlu0 %784
    %786 = vrot.lane.b32.xlu0 %v781, 127
    %v787 = vpop.permute.xlu0 %786
    %v790 = vadd.f32 %v752, %v785
    %v791 = vadd.f32 %v753, %v787
    %s792 = sld [smem:[#allocation2 + $0x28]]
    %v793 = vstv %s792
    %v794 = vmul.f32 %v793, %v746
    %v795 = vmul.f32 %v793, %v747
    %798 = vrot.lane.b32.xlu0 %v794, 127
    %v799 = vpop.permute.xlu0 %798
    %800 = vrot.lane.b32.xlu0 %v795, 127
    %v801 = vpop.permute.xlu0 %800
    %v804 = vadd.f32 %v758, %v799
    %v805 = vadd.f32 %v759, %v801
    %s806 = sld [smem:[#allocation2 + $0x43]]
    %v807 = vstv %s806
    %v808 = vmul.f32 %v807, %v746
    %v809 = vmul.f32 %v807, %v747
    %812 = vrot.lane.b32.xlu0 %v808, 127
    %v813 = vpop.permute.xlu0 %812
    %814 = vrot.lane.b32.xlu0 %v809, 127
    %v815 = vpop.permute.xlu0 %814
    %v818 = vadd.f32 %v764, %v813
    %v819 = vadd.f32 %v765, %v815
    %s820 = sld [smem:[#allocation2 + $0x5e]]
    %v821 = vstv %s820
    %v822 = vmul.f32 %v821, %v746
    %v823 = vmul.f32 %v821, %v747
    %826 = vrot.lane.b32.xlu0 %v822, 127
    %v827 = vpop.permute.xlu0 %826
    %828 = vrot.lane.b32.xlu0 %v823, 127
    %v829 = vpop.permute.xlu0 %828
    %v832 = vadd.f32 %v770, %v827
    %v833 = vadd.f32 %v771, %v829
    %s834 = sld [smem:[#allocation2 + $0x79]]
    %v835 = vstv %s834
    %v836 = vmul.f32 %v835, %v746
    %v837 = vmul.f32 %v835, %v747
    %840 = vrot.lane.b32.xlu0 %v836, 127
    %v841 = vpop.permute.xlu0 %840
    %842 = vrot.lane.b32.xlu0 %v837, 127
    %v843 = vpop.permute.xlu0 %842
    %v846 = vadd.f32 %v776, %v841
    %v847 = vadd.f32 %v777, %v843
    %s848 = sld [smem:[#allocation2 + $0xe]]
    %v849 = vstv %s848
    %v850 = vmul.f32 %v849, %v746
    %v851 = vmul.f32 %v849, %v747
    %854 = vrot.lane.b32.xlu0 %v850, 126
    %v855 = vpop.permute.xlu0 %854
    %856 = vrot.lane.b32.xlu0 %v851, 126
    %v857 = vpop.permute.xlu0 %856
    %v860 = vadd.f32 %v790, %v855
    %v861 = vadd.f32 %v791, %v857
    %s862 = sld [smem:[#allocation2 + $0x29]]
    %v863 = vstv %s862
    %v864 = vmul.f32 %v863, %v746
    %v865 = vmul.f32 %v863, %v747
    %868 = vrot.lane.b32.xlu0 %v864, 126
    %v869 = vpop.permute.xlu0 %868
    %870 = vrot.lane.b32.xlu0 %v865, 126
    %v871 = vpop.permute.xlu0 %870
    %v874 = vadd.f32 %v804, %v869
    %v875 = vadd.f32 %v805, %v871
    %s876 = sld [smem:[#allocation2 + $0x44]]
    %v877 = vstv %s876
    %v878 = vmul.f32 %v877, %v746
    %v879 = vmul.f32 %v877, %v747
    %882 = vrot.lane.b32.xlu0 %v878, 126
    %v883 = vpop.permute.xlu0 %882
    %884 = vrot.lane.b32.xlu0 %v879, 126
    %v885 = vpop.permute.xlu0 %884
    %v888 = vadd.f32 %v818, %v883
    %v889 = vadd.f32 %v819, %v885
    %s890 = sld [smem:[#allocation2 + $0x5f]]
    %v891 = vstv %s890
    %v892 = vmul.f32 %v891, %v746
    %v893 = vmul.f32 %v891, %v747
    %896 = vrot.lane.b32.xlu0 %v892, 126
    %v897 = vpop.permute.xlu0 %896
    %898 = vrot.lane.b32.xlu0 %v893, 126
    %v899 = vpop.permute.xlu0 %898
    %v902 = vadd.f32 %v832, %v897
    %v903 = vadd.f32 %v833, %v899
    %s904 = sld [smem:[#allocation2 + $0x7a]]
    %v905 = vstv %s904
    %v906 = vmul.f32 %v905, %v746
    %v907 = vmul.f32 %v905, %v747
    %910 = vrot.lane.b32.xlu0 %v906, 126
    %v911 = vpop.permute.xlu0 %910
    %912 = vrot.lane.b32.xlu0 %v907, 126
    %v913 = vpop.permute.xlu0 %912
    %v916 = vadd.f32 %v846, %v911
    %v917 = vadd.f32 %v847, %v913
    %v918 = vld [vmem:[%s573 + $0x2] sm:$0xff]
    %v919 = vld [vmem:[%s573 + $0xa] sm:$0x1f]
    %s920 = sld [smem:[#allocation2 + $0xf]]
    %v921 = vstv %s920
    %v922 = vmul.f32 %v921, %v918
    %v923 = vmul.f32 %v921, %v919
    %v924 = vadd.f32 %v860, %v922
    %v925 = vadd.f32 %v861, %v923
    %s926 = sld [smem:[#allocation2 + $0x2a]]
    %v927 = vstv %s926
    %v928 = vmul.f32 %v927, %v918
    %v929 = vmul.f32 %v927, %v919
    %v930 = vadd.f32 %v874, %v928
    %v931 = vadd.f32 %v875, %v929
    %s932 = sld [smem:[#allocation2 + $0x45]]
    %v933 = vstv %s932
    %v934 = vmul.f32 %v933, %v918
    %v935 = vmul.f32 %v933, %v919
    %v936 = vadd.f32 %v888, %v934
    %v937 = vadd.f32 %v889, %v935
    %s938 = sld [smem:[#allocation2 + $0x60]]
    %v939 = vstv %s938
    %v940 = vmul.f32 %v939, %v918
    %v941 = vmul.f32 %v939, %v919
    %v942 = vadd.f32 %v902, %v940
    %v943 = vadd.f32 %v903, %v941
    %s944 = sld [smem:[#allocation2 + $0x7b]]
    %v945 = vstv %s944
    %v946 = vmul.f32 %v945, %v918
    %v947 = vmul.f32 %v945, %v919
    %v948 = vadd.f32 %v916, %v946
    %v949 = vadd.f32 %v917, %v947
    %s950 = sld [smem:[#allocation2 + $0x10]]
    %v951 = vstv %s950
    %v952 = vmul.f32 %v951, %v918
    %v953 = vmul.f32 %v951, %v919
    %956 = vrot.lane.b32.xlu0 %v952, 127
    %v957 = vpop.permute.xlu0 %956
    %958 = vrot.lane.b32.xlu0 %v953, 127
    %v959 = vpop.permute.xlu0 %958
    %v962 = vadd.f32 %v924, %v957
    %v963 = vadd.f32 %v925, %v959
    %s964 = sld [smem:[#allocation2 + $0x2b]]
    %v965 = vstv %s964
    %v966 = vmul.f32 %v965, %v918
    %v967 = vmul.f32 %v965, %v919
    %970 = vrot.lane.b32.xlu0 %v966, 127
    %v971 = vpop.permute.xlu0 %970
    %972 = vrot.lane.b32.xlu0 %v967, 127
    %v973 = vpop.permute.xlu0 %972
    %v976 = vadd.f32 %v930, %v971
    %v977 = vadd.f32 %v931, %v973
    %s978 = sld [smem:[#allocation2 + $0x46]]
    %v979 = vstv %s978
    %v980 = vmul.f32 %v979, %v918
    %v981 = vmul.f32 %v979, %v919
    %984 = vrot.lane.b32.xlu0 %v980, 127
    %v985 = vpop.permute.xlu0 %984
    %986 = vrot.lane.b32.xlu0 %v981, 127
    %v987 = vpop.permute.xlu0 %986
    %v990 = vadd.f32 %v936, %v985
    %v991 = vadd.f32 %v937, %v987
    %s992 = sld [smem:[#allocation2 + $0x61]]
    %v993 = vstv %s992
    %v994 = vmul.f32 %v993, %v918
    %v995 = vmul.f32 %v993, %v919
    %998 = vrot.lane.b32.xlu0 %v994, 127
    %v999 = vpop.permute.xlu0 %998
    %1000 = vrot.lane.b32.xlu0 %v995, 127
    %v1001 = vpop.permute.xlu0 %1000
    %v1004 = vadd.f32 %v942, %v999
    %v1005 = vadd.f32 %v943, %v1001
    %s1006 = sld [smem:[#allocation2 + $0x7c]]
    %v1007 = vstv %s1006
    %v1008 = vmul.f32 %v1007, %v918
    %v1009 = vmul.f32 %v1007, %v919
    %1012 = vrot.lane.b32.xlu0 %v1008, 127
    %v1013 = vpop.permute.xlu0 %1012
    %1014 = vrot.lane.b32.xlu0 %v1009, 127
    %v1015 = vpop.permute.xlu0 %1014
    %v1018 = vadd.f32 %v948, %v1013
    %v1019 = vadd.f32 %v949, %v1015
    %s1020 = sld [smem:[#allocation2 + $0x11]]
    %v1021 = vstv %s1020
    %v1022 = vmul.f32 %v1021, %v918
    %v1023 = vmul.f32 %v1021, %v919
    %1026 = vrot.lane.b32.xlu0 %v1022, 126
    %v1027 = vpop.permute.xlu0 %1026
    %1028 = vrot.lane.b32.xlu0 %v1023, 126
    %v1029 = vpop.permute.xlu0 %1028
    %v1032 = vadd.f32 %v962, %v1027
    %v1033 = vadd.f32 %v963, %v1029
    %s1034 = sld [smem:[#allocation2 + $0x2c]]
    %v1035 = vstv %s1034
    %v1036 = vmul.f32 %v1035, %v918
    %v1037 = vmul.f32 %v1035, %v919
    %1040 = vrot.lane.b32.xlu0 %v1036, 126
    %v1041 = vpop.permute.xlu0 %1040
    %1042 = vrot.lane.b32.xlu0 %v1037, 126
    %v1043 = vpop.permute.xlu0 %1042
    %v1046 = vadd.f32 %v976, %v1041
    %v1047 = vadd.f32 %v977, %v1043
    %s1048 = sld [smem:[#allocation2 + $0x47]]
    %v1049 = vstv %s1048
    %v1050 = vmul.f32 %v1049, %v918
    %v1051 = vmul.f32 %v1049, %v919
    %1054 = vrot.lane.b32.xlu0 %v1050, 126
    %v1055 = vpop.permute.xlu0 %1054
    %1056 = vrot.lane.b32.xlu0 %v1051, 126
    %v1057 = vpop.permute.xlu0 %1056
    %v1060 = vadd.f32 %v990, %v1055
    %v1061 = vadd.f32 %v991, %v1057
    %s1062 = sld [smem:[#allocation2 + $0x62]]
    %v1063 = vstv %s1062
    %v1064 = vmul.f32 %v1063, %v918
    %v1065 = vmul.f32 %v1063, %v919
    %1068 = vrot.lane.b32.xlu0 %v1064, 126
    %v1069 = vpop.permute.xlu0 %1068
    %1070 = vrot.lane.b32.xlu0 %v1065, 126
    %v1071 = vpop.permute.xlu0 %1070
    %v1074 = vadd.f32 %v1004, %v1069
    %v1075 = vadd.f32 %v1005, %v1071
    %s1076 = sld [smem:[#allocation2 + $0x7d]]
    %v1077 = vstv %s1076
    %v1078 = vmul.f32 %v1077, %v918
    %v1079 = vmul.f32 %v1077, %v919
    %1082 = vrot.lane.b32.xlu0 %v1078, 126
    %v1083 = vpop.permute.xlu0 %1082
    %1084 = vrot.lane.b32.xlu0 %v1079, 126
    %v1085 = vpop.permute.xlu0 %1084
    %v1088 = vadd.f32 %v1018, %v1083
    %v1089 = vadd.f32 %v1019, %v1085
    %s1090 = scalar_lea.vmem %s2, 32
    %v1091 = vld [vmem:[%s1090] sm:$0xff]
    %v1092 = vld [vmem:[%s1090 + $0x8] sm:$0x1f]
    %s1093 = sld [smem:[#allocation2 + $0x12]]
    %v1094 = vstv %s1093
    %v1095 = vmul.f32 %v1094, %v1091
    %v1096 = vmul.f32 %v1094, %v1092
    %v1097 = vadd.f32 %v1032, %v1095
    %v1098 = vadd.f32 %v1033, %v1096
    %s1099 = sld [smem:[#allocation2 + $0x2d]]
    %v1100 = vstv %s1099
    %v1101 = vmul.f32 %v1100, %v1091
    %v1102 = vmul.f32 %v1100, %v1092
    %v1103 = vadd.f32 %v1046, %v1101
    %v1104 = vadd.f32 %v1047, %v1102
    %s1105 = sld [smem:[#allocation2 + $0x48]]
    %v1106 = vstv %s1105
    %v1107 = vmul.f32 %v1106, %v1091
    %v1108 = vmul.f32 %v1106, %v1092
    %v1109 = vadd.f32 %v1060, %v1107
    %v1110 = vadd.f32 %v1061, %v1108
    %s1111 = sld [smem:[#allocation2 + $0x63]]
    %v1112 = vstv %s1111
    %v1113 = vmul.f32 %v1112, %v1091
    %v1114 = vmul.f32 %v1112, %v1092
    %v1115 = vadd.f32 %v1074, %v1113
    %v1116 = vadd.f32 %v1075, %v1114
    %s1117 = sld [smem:[#allocation2 + $0x7e]]
    %v1118 = vstv %s1117
    %v1119 = vmul.f32 %v1118, %v1091
    %v1120 = vmul.f32 %v1118, %v1092
    %v1121 = vadd.f32 %v1088, %v1119
    %v1122 = vadd.f32 %v1089, %v1120
    %s1123 = sld [smem:[#allocation2 + $0x13]]
    %v1124 = vstv %s1123
    %v1125 = vmul.f32 %v1124, %v1091
    %v1126 = vmul.f32 %v1124, %v1092
    %1129 = vrot.lane.b32.xlu0 %v1125, 127
    %v1130 = vpop.permute.xlu0 %1129
    %1131 = vrot.lane.b32.xlu0 %v1126, 127
    %v1132 = vpop.permute.xlu0 %1131
    %v1135 = vadd.f32 %v1097, %v1130
    %v1136 = vadd.f32 %v1098, %v1132
    %s1137 = sld [smem:[#allocation2 + $0x2e]]
    %v1138 = vstv %s1137
    %v1139 = vmul.f32 %v1138, %v1091
    %v1140 = vmul.f32 %v1138, %v1092
    %1143 = vrot.lane.b32.xlu0 %v1139, 127
    %v1144 = vpop.permute.xlu0 %1143
    %1145 = vrot.lane.b32.xlu0 %v1140, 127
    %v1146 = vpop.permute.xlu0 %1145
    %v1149 = vadd.f32 %v1103, %v1144
    %v1150 = vadd.f32 %v1104, %v1146
    %s1151 = sld [smem:[#allocation2 + $0x49]]
    %v1152 = vstv %s1151
    %v1153 = vmul.f32 %v1152, %v1091
    %v1154 = vmul.f32 %v1152, %v1092
    %1157 = vrot.lane.b32.xlu0 %v1153, 127
    %v1158 = vpop.permute.xlu0 %1157
    %1159 = vrot.lane.b32.xlu0 %v1154, 127
    %v1160 = vpop.permute.xlu0 %1159
    %v1163 = vadd.f32 %v1109, %v1158
    %v1164 = vadd.f32 %v1110, %v1160
    %s1165 = sld [smem:[#allocation2 + $0x64]]
    %v1166 = vstv %s1165
    %v1167 = vmul.f32 %v1166, %v1091
    %v1168 = vmul.f32 %v1166, %v1092
    %1171 = vrot.lane.b32.xlu0 %v1167, 127
    %v1172 = vpop.permute.xlu0 %1171
    %1173 = vrot.lane.b32.xlu0 %v1168, 127
    %v1174 = vpop.permute.xlu0 %1173
    %v1177 = vadd.f32 %v1115, %v1172
    %v1178 = vadd.f32 %v1116, %v1174
    %s1179 = sld [smem:[#allocation2 + $0x7f]]
    %v1180 = vstv %s1179
    %v1181 = vmul.f32 %v1180, %v1091
    %v1182 = vmul.f32 %v1180, %v1092
    %1185 = vrot.lane.b32.xlu0 %v1181, 127
    %v1186 = vpop.permute.xlu0 %1185
    %1187 = vrot.lane.b32.xlu0 %v1182, 127
    %v1188 = vpop.permute.xlu0 %1187
    %v1191 = vadd.f32 %v1121, %v1186
    %v1192 = vadd.f32 %v1122, %v1188
    %s1193 = sld [smem:[#allocation2 + $0x14]]
    %v1194 = vstv %s1193
    %v1195 = vmul.f32 %v1194, %v1091
    %v1196 = vmul.f32 %v1194, %v1092
    %1199 = vrot.lane.b32.xlu0 %v1195, 126
    %v1200 = vpop.permute.xlu0 %1199
    %1201 = vrot.lane.b32.xlu0 %v1196, 126
    %v1202 = vpop.permute.xlu0 %1201
    %v1205 = vadd.f32 %v1135, %v1200
    %v1206 = vadd.f32 %v1136, %v1202
    %s1207 = sld [smem:[#allocation2 + $0x2f]]
    %v1208 = vstv %s1207
    %v1209 = vmul.f32 %v1208, %v1091
    %v1210 = vmul.f32 %v1208, %v1092
    %1213 = vrot.lane.b32.xlu0 %v1209, 126
    %v1214 = vpop.permute.xlu0 %1213
    %1215 = vrot.lane.b32.xlu0 %v1210, 126
    %v1216 = vpop.permute.xlu0 %1215
    %v1219 = vadd.f32 %v1149, %v1214
    %v1220 = vadd.f32 %v1150, %v1216
    %s1221 = sld [smem:[#allocation2 + $0x4a]]
    %v1222 = vstv %s1221
    %v1223 = vmul.f32 %v1222, %v1091
    %v1224 = vmul.f32 %v1222, %v1092
    %1227 = vrot.lane.b32.xlu0 %v1223, 126
    %v1228 = vpop.permute.xlu0 %1227
    %1229 = vrot.lane.b32.xlu0 %v1224, 126
    %v1230 = vpop.permute.xlu0 %1229
    %v1233 = vadd.f32 %v1163, %v1228
    %v1234 = vadd.f32 %v1164, %v1230
    %s1235 = sld [smem:[#allocation2 + $0x65]]
    %v1236 = vstv %s1235
    %v1237 = vmul.f32 %v1236, %v1091
    %v1238 = vmul.f32 %v1236, %v1092
    %1241 = vrot.lane.b32.xlu0 %v1237, 126
    %v1242 = vpop.permute.xlu0 %1241
    %1243 = vrot.lane.b32.xlu0 %v1238, 126
    %v1244 = vpop.permute.xlu0 %1243
    %v1247 = vadd.f32 %v1177, %v1242
    %v1248 = vadd.f32 %v1178, %v1244
    %s1249 = sld [smem:[#allocation2 + $0x80]]
    %v1250 = vstv %s1249
    %v1251 = vmul.f32 %v1250, %v1091
    %v1252 = vmul.f32 %v1250, %v1092
    %1255 = vrot.lane.b32.xlu0 %v1251, 126
    %v1256 = vpop.permute.xlu0 %1255
    %1257 = vrot.lane.b32.xlu0 %v1252, 126
    %v1258 = vpop.permute.xlu0 %1257
    %v1261 = vadd.f32 %v1191, %v1256
    %v1262 = vadd.f32 %v1192, %v1258
    %v1263 = vld [vmem:[%s1090 + $0x1] sm:$0xff]
    %v1264 = vld [vmem:[%s1090 + $0x9] sm:$0x1f]
    %s1265 = sld [smem:[#allocation2 + $0x15]]
    %v1266 = vstv %s1265
    %v1267 = vmul.f32 %v1266, %v1263
    %v1268 = vmul.f32 %v1266, %v1264
    %v1269 = vadd.f32 %v1205, %v1267
    %v1270 = vadd.f32 %v1206, %v1268
    %s1271 = sld [smem:[#allocation2 + $0x30]]
    %v1272 = vstv %s1271
    %v1273 = vmul.f32 %v1272, %v1263
    %v1274 = vmul.f32 %v1272, %v1264
    %v1275 = vadd.f32 %v1219, %v1273
    %v1276 = vadd.f32 %v1220, %v1274
    %s1277 = sld [smem:[#allocation2 + $0x4b]]
    %v1278 = vstv %s1277
    %v1279 = vmul.f32 %v1278, %v1263
    %v1280 = vmul.f32 %v1278, %v1264
    %v1281 = vadd.f32 %v1233, %v1279
    %v1282 = vadd.f32 %v1234, %v1280
    %s1283 = sld [smem:[#allocation2 + $0x66]]
    %v1284 = vstv %s1283
    %v1285 = vmul.f32 %v1284, %v1263
    %v1286 = vmul.f32 %v1284, %v1264
    %v1287 = vadd.f32 %v1247, %v1285
    %v1288 = vadd.f32 %v1248, %v1286
    %s1289 = sld [smem:[#allocation2 + $0x81]]
    %v1290 = vstv %s1289
    %v1291 = vmul.f32 %v1290, %v1263
    %v1292 = vmul.f32 %v1290, %v1264
    %v1293 = vadd.f32 %v1261, %v1291
    %v1294 = vadd.f32 %v1262, %v1292
    %s1295 = sld [smem:[#allocation2 + $0x16]]
    %v1296 = vstv %s1295
    %v1297 = vmul.f32 %v1296, %v1263
    %v1298 = vmul.f32 %v1296, %v1264
    %1301 = vrot.lane.b32.xlu0 %v1297, 127
    %v1302 = vpop.permute.xlu0 %1301
    %1303 = vrot.lane.b32.xlu0 %v1298, 127
    %v1304 = vpop.permute.xlu0 %1303
    %v1307 = vadd.f32 %v1269, %v1302
    %v1308 = vadd.f32 %v1270, %v1304
    %s1309 = sld [smem:[#allocation2 + $0x31]]
    %v1310 = vstv %s1309
    %v1311 = vmul.f32 %v1310, %v1263
    %v1312 = vmul.f32 %v1310, %v1264
    %1315 = vrot.lane.b32.xlu0 %v1311, 127
    %v1316 = vpop.permute.xlu0 %1315
    %1317 = vrot.lane.b32.xlu0 %v1312, 127
    %v1318 = vpop.permute.xlu0 %1317
    %v1321 = vadd.f32 %v1275, %v1316
    %v1322 = vadd.f32 %v1276, %v1318
    %s1323 = sld [smem:[#allocation2 + $0x4c]]
    %v1324 = vstv %s1323
    %v1325 = vmul.f32 %v1324, %v1263
    %v1326 = vmul.f32 %v1324, %v1264
    %1329 = vrot.lane.b32.xlu0 %v1325, 127
    %v1330 = vpop.permute.xlu0 %1329
    %1331 = vrot.lane.b32.xlu0 %v1326, 127
    %v1332 = vpop.permute.xlu0 %1331
    %v1335 = vadd.f32 %v1281, %v1330
    %v1336 = vadd.f32 %v1282, %v1332
    %s1337 = sld [smem:[#allocation2 + $0x67]]
    %v1338 = vstv %s1337
    %v1339 = vmul.f32 %v1338, %v1263
    %v1340 = vmul.f32 %v1338, %v1264
    %1343 = vrot.lane.b32.xlu0 %v1339, 127
    %v1344 = vpop.permute.xlu0 %1343
    %1345 = vrot.lane.b32.xlu0 %v1340, 127
    %v1346 = vpop.permute.xlu0 %1345
    %v1349 = vadd.f32 %v1287, %v1344
    %v1350 = vadd.f32 %v1288, %v1346
    %s1351 = sld [smem:[#allocation2 + $0x82]]
    %v1352 = vstv %s1351
    %v1353 = vmul.f32 %v1352, %v1263
    %v1354 = vmul.f32 %v1352, %v1264
    %1357 = vrot.lane.b32.xlu0 %v1353, 127
    %v1358 = vpop.permute.xlu0 %1357
    %1359 = vrot.lane.b32.xlu0 %v1354, 127
    %v1360 = vpop.permute.xlu0 %1359
    %v1363 = vadd.f32 %v1293, %v1358
    %v1364 = vadd.f32 %v1294, %v1360
    %s1365 = sld [smem:[#allocation2 + $0x17]]
    %v1366 = vstv %s1365
    %v1367 = vmul.f32 %v1366, %v1263
    %v1368 = vmul.f32 %v1366, %v1264
    %1371 = vrot.lane.b32.xlu0 %v1367, 126
    %v1372 = vpop.permute.xlu0 %1371
    %1373 = vrot.lane.b32.xlu0 %v1368, 126
    %v1374 = vpop.permute.xlu0 %1373
    %v1377 = vadd.f32 %v1307, %v1372
    %v1378 = vadd.f32 %v1308, %v1374
    %s1379 = sld [smem:[#allocation2 + $0x32]]
    %v1380 = vstv %s1379
    %v1381 = vmul.f32 %v1380, %v1263
    %v1382 = vmul.f32 %v1380, %v1264
    %1385 = vrot.lane.b32.xlu0 %v1381, 126
    %v1386 = vpop.permute.xlu0 %1385
    %1387 = vrot.lane.b32.xlu0 %v1382, 126
    %v1388 = vpop.permute.xlu0 %1387
    %v1391 = vadd.f32 %v1321, %v1386
    %v1392 = vadd.f32 %v1322, %v1388
    %s1393 = sld [smem:[#allocation2 + $0x4d]]
    %v1394 = vstv %s1393
    %v1395 = vmul.f32 %v1394, %v1263
    %v1396 = vmul.f32 %v1394, %v1264
    %1399 = vrot.lane.b32.xlu0 %v1395, 126
    %v1400 = vpop.permute.xlu0 %1399
    %1401 = vrot.lane.b32.xlu0 %v1396, 126
    %v1402 = vpop.permute.xlu0 %1401
    %v1405 = vadd.f32 %v1335, %v1400
    %v1406 = vadd.f32 %v1336, %v1402
    %s1407 = sld [smem:[#allocation2 + $0x68]]
    %v1408 = vstv %s1407
    %v1409 = vmul.f32 %v1408, %v1263
    %v1410 = vmul.f32 %v1408, %v1264
    %1413 = vrot.lane.b32.xlu0 %v1409, 126
    %v1414 = vpop.permute.xlu0 %1413
    %1415 = vrot.lane.b32.xlu0 %v1410, 126
    %v1416 = vpop.permute.xlu0 %1415
    %v1419 = vadd.f32 %v1349, %v1414
    %v1420 = vadd.f32 %v1350, %v1416
    %s1421 = sld [smem:[#allocation2 + $0x83]]
    %v1422 = vstv %s1421
    %v1423 = vmul.f32 %v1422, %v1263
    %v1424 = vmul.f32 %v1422, %v1264
    %1427 = vrot.lane.b32.xlu0 %v1423, 126
    %v1428 = vpop.permute.xlu0 %1427
    %1429 = vrot.lane.b32.xlu0 %v1424, 126
    %v1430 = vpop.permute.xlu0 %1429
    %v1433 = vadd.f32 %v1363, %v1428
    %v1434 = vadd.f32 %v1364, %v1430
    %v1435 = vld [vmem:[%s1090 + $0x2] sm:$0xff]
    %v1436 = vld [vmem:[%s1090 + $0xa] sm:$0x1f]
    %s1437 = sld [smem:[#allocation2 + $0x18]]
    %v1438 = vstv %s1437
    %v1439 = vmul.f32 %v1438, %v1435
    %v1440 = vmul.f32 %v1438, %v1436
    %v1441 = vadd.f32 %v1377, %v1439
    %v1442 = vadd.f32 %v1378, %v1440
    %s1443 = sld [smem:[#allocation2 + $0x33]]
    %v1444 = vstv %s1443
    %v1445 = vmul.f32 %v1444, %v1435
    %v1446 = vmul.f32 %v1444, %v1436
    %v1447 = vadd.f32 %v1391, %v1445
    %v1448 = vadd.f32 %v1392, %v1446
    %s1449 = sld [smem:[#allocation2 + $0x4e]]
    %v1450 = vstv %s1449
    %v1451 = vmul.f32 %v1450, %v1435
    %v1452 = vmul.f32 %v1450, %v1436
    %v1453 = vadd.f32 %v1405, %v1451
    %v1454 = vadd.f32 %v1406, %v1452
    %s1455 = sld [smem:[#allocation2 + $0x69]]
    %v1456 = vstv %s1455
    %v1457 = vmul.f32 %v1456, %v1435
    %v1458 = vmul.f32 %v1456, %v1436
    %v1459 = vadd.f32 %v1419, %v1457
    %v1460 = vadd.f32 %v1420, %v1458
    %s1461 = sld [smem:[#allocation2 + $0x84]]
    %v1462 = vstv %s1461
    %v1463 = vmul.f32 %v1462, %v1435
    %v1464 = vmul.f32 %v1462, %v1436
    %v1465 = vadd.f32 %v1433, %v1463
    %v1466 = vadd.f32 %v1434, %v1464
    %s1467 = sld [smem:[#allocation2 + $0x19]]
    %v1468 = vstv %s1467
    %v1469 = vmul.f32 %v1468, %v1435
    %v1470 = vmul.f32 %v1468, %v1436
    %1473 = vrot.lane.b32.xlu0 %v1469, 127
    %v1474 = vpop.permute.xlu0 %1473
    %1475 = vrot.lane.b32.xlu0 %v1470, 127
    %v1476 = vpop.permute.xlu0 %1475
    %v1479 = vadd.f32 %v1441, %v1474
    %v1480 = vadd.f32 %v1442, %v1476
    %s1481 = sld [smem:[#allocation2 + $0x34]]
    %v1482 = vstv %s1481
    %v1483 = vmul.f32 %v1482, %v1435
    %v1484 = vmul.f32 %v1482, %v1436
    %1487 = vrot.lane.b32.xlu0 %v1483, 127
    %v1488 = vpop.permute.xlu0 %1487
    %1489 = vrot.lane.b32.xlu0 %v1484, 127
    %v1490 = vpop.permute.xlu0 %1489
    %v1493 = vadd.f32 %v1447, %v1488
    %v1494 = vadd.f32 %v1448, %v1490
    %s1495 = sld [smem:[#allocation2 + $0x4f]]
    %v1496 = vstv %s1495
    %v1497 = vmul.f32 %v1496, %v1435
    %v1498 = vmul.f32 %v1496, %v1436
    %1501 = vrot.lane.b32.xlu0 %v1497, 127
    %v1502 = vpop.permute.xlu0 %1501
    %1503 = vrot.lane.b32.xlu0 %v1498, 127
    %v1504 = vpop.permute.xlu0 %1503
    %v1507 = vadd.f32 %v1453, %v1502
    %v1508 = vadd.f32 %v1454, %v1504
    %s1509 = sld [smem:[#allocation2 + $0x6a]]
    %v1510 = vstv %s1509
    %v1511 = vmul.f32 %v1510, %v1435
    %v1512 = vmul.f32 %v1510, %v1436
    %1515 = vrot.lane.b32.xlu0 %v1511, 127
    %v1516 = vpop.permute.xlu0 %1515
    %1517 = vrot.lane.b32.xlu0 %v1512, 127
    %v1518 = vpop.permute.xlu0 %1517
    %v1521 = vadd.f32 %v1459, %v1516
    %v1522 = vadd.f32 %v1460, %v1518
    %s1523 = sld [smem:[#allocation2 + $0x85]]
    %v1524 = vstv %s1523
    %v1525 = vmul.f32 %v1524, %v1435
    %v1526 = vmul.f32 %v1524, %v1436
    %1529 = vrot.lane.b32.xlu0 %v1525, 127
    %v1530 = vpop.permute.xlu0 %1529
    %1531 = vrot.lane.b32.xlu0 %v1526, 127
    %v1532 = vpop.permute.xlu0 %1531
    %v1535 = vadd.f32 %v1465, %v1530
    %v1536 = vadd.f32 %v1466, %v1532
    %s1537 = sld [smem:[#allocation2 + $0x1a]]
    %v1538 = vstv %s1537
    %v1539 = vmul.f32 %v1538, %v1435
    %v1540 = vmul.f32 %v1538, %v1436
    %1543 = vrot.lane.b32.xlu0 %v1539, 126
    %v1544 = vpop.permute.xlu0 %1543
    %1545 = vrot.lane.b32.xlu0 %v1540, 126
    %v1546 = vpop.permute.xlu0 %1545
    %v1549 = vadd.f32 %v1479, %v1544
    %v1550 = vadd.f32 %v1480, %v1546
    %s1551 = sld [smem:[#allocation2 + $0x35]]
    %v1552 = vstv %s1551
    %v1553 = vmul.f32 %v1552, %v1435
    %v1554 = vmul.f32 %v1552, %v1436
    %1557 = vrot.lane.b32.xlu0 %v1553, 126
    %v1558 = vpop.permute.xlu0 %1557
    %1559 = vrot.lane.b32.xlu0 %v1554, 126
    %v1560 = vpop.permute.xlu0 %1559
    %v1563 = vadd.f32 %v1493, %v1558
    %v1564 = vadd.f32 %v1494, %v1560
    %s1565 = sld [smem:[#allocation2 + $0x50]]
    %v1566 = vstv %s1565
    %v1567 = vmul.f32 %v1566, %v1435
    %v1568 = vmul.f32 %v1566, %v1436
    %1571 = vrot.lane.b32.xlu0 %v1567, 126
    %v1572 = vpop.permute.xlu0 %1571
    %1573 = vrot.lane.b32.xlu0 %v1568, 126
    %v1574 = vpop.permute.xlu0 %1573
    %v1577 = vadd.f32 %v1507, %v1572
    %v1578 = vadd.f32 %v1508, %v1574
    %s1579 = sld [smem:[#allocation2 + $0x6b]]
    %v1580 = vstv %s1579
    %v1581 = vmul.f32 %v1580, %v1435
    %v1582 = vmul.f32 %v1580, %v1436
    %1585 = vrot.lane.b32.xlu0 %v1581, 126
    %v1586 = vpop.permute.xlu0 %1585
    %1587 = vrot.lane.b32.xlu0 %v1582, 126
    %v1588 = vpop.permute.xlu0 %1587
    %v1591 = vadd.f32 %v1521, %v1586
    %v1592 = vadd.f32 %v1522, %v1588
    %s1593 = sld [smem:[#allocation2 + $0x86]]
    %v1594 = vstv %s1593
    %v1595 = vmul.f32 %v1594, %v1435
    %v1596 = vmul.f32 %v1594, %v1436
    %1599 = vrot.lane.b32.xlu0 %v1595, 126
    %v1600 = vpop.permute.xlu0 %1599
    %1601 = vrot.lane.b32.xlu0 %v1596, 126
    %v1602 = vpop.permute.xlu0 %1601
    %v1605 = vadd.f32 %v1535, %v1600
    %v1606 = vadd.f32 %v1536, %v1602
    %v1607 = vld [vmem:[%s3] sm:$0xff]
    %v1608 = vld [vmem:[%s3 + $0x8] sm:$0x1f]
    %v1609 = vadd.f32 %v1549, %v1607
    %v1610 = vadd.f32 %v1550, %v1608
    %vm1611 = vcmask 105472
    %1612 = vst.msk [vmem:[%s4] sm:$0xff] %vm1611, %v1609
    %vm1613 = vcmask 102400
    %1614 = vst.msk [vmem:[%s4 + $0x8] sm:$0x1f] %vm1613, %v1610
    %s1615 = scalar_lea.vmem %s3, 16
    %v1616 = vld [vmem:[%s1615] sm:$0xff]
    %v1617 = vld [vmem:[%s1615 + $0x8] sm:$0x1f]
    %v1618 = vadd.f32 %v1563, %v1616
    %v1619 = vadd.f32 %v1564, %v1617
    %s1620 = scalar_lea.vmem %s4, 16
    %1621 = vst.msk [vmem:[%s1620] sm:$0xff] %vm1611, %v1618
    %1622 = vst.msk [vmem:[%s1620 + $0x8] sm:$0x1f] %vm1613, %v1619
    %s1623 = scalar_lea.vmem %s3, 32
    %v1624 = vld [vmem:[%s1623] sm:$0xff]
    %v1625 = vld [vmem:[%s1623 + $0x8] sm:$0x1f]
    %v1626 = vadd.f32 %v1577, %v1624
    %v1627 = vadd.f32 %v1578, %v1625
    %s1628 = scalar_lea.vmem %s4, 32
    %1629 = vst.msk [vmem:[%s1628] sm:$0xff] %vm1611, %v1626
    %1630 = vst.msk [vmem:[%s1628 + $0x8] sm:$0x1f] %vm1613, %v1627
    %s1631 = scalar_lea.vmem %s3, 48
    %v1632 = vld [vmem:[%s1631] sm:$0xff]
    %v1633 = vld [vmem:[%s1631 + $0x8] sm:$0x1f]
    %v1634 = vadd.f32 %v1591, %v1632
    %v1635 = vadd.f32 %v1592, %v1633
    %s1636 = scalar_lea.vmem %s4, 48
    %1637 = vst.msk [vmem:[%s1636] sm:$0xff] %vm1611, %v1634
    %1638 = vst.msk [vmem:[%s1636 + $0x8] sm:$0x1f] %vm1613, %v1635
    %s1639 = scalar_lea.vmem %s3, 64
    %v1640 = vld [vmem:[%s1639] sm:$0xff]
    %v1641 = vld [vmem:[%s1639 + $0x8] sm:$0x1f]
    %v1642 = vadd.f32 %v1605, %v1640
    %v1643 = vadd.f32 %v1606, %v1641
    %s1644 = scalar_lea.vmem %s4, 64
    %1645 = vst.msk [vmem:[%s1644] sm:$0xff] %vm1611, %v1642
    %1646 = vst.msk [vmem:[%s1644 + $0x8] sm:$0x1f] %vm1613, %v1643
    // Predicated region
    $region26: #{tpu_custom_call.1} parent=1 // pred_check
      _
    $region27: #{tpu_custom_call.1} parent=1 // pred_check_branch
      %1648 = sbr.rel (0) target = $region29
    $region28: #{tpu_custom_call.1} parent=1 // pred_region
      _
    $region29: #{tpu_custom_call.1} parent=1 // pred_fallthru
      _
    // Predicated region
    $region30: #{tpu_custom_call.1} parent=1 // pred_check
      _
    $region31: #{tpu_custom_call.1} parent=1 // pred_check_branch
      %1650 = sbr.rel (0) target = $region33
    $region32: #{tpu_custom_call.1} parent=1 // pred_region
      _
    $region33: #{tpu_custom_call.1} parent=1 // pred_fallthru
      _
    %1651 = vsyncpa [#allocation3], 1
    %1652 = vsyncpa [#allocation5], 1

</llo_original>
